<compile_context>
chip_gen: v7x
topology: tpu7x:2x2x1
jax: 0.10.0
libtpu: 0.0.40
codegen_flags: <defaults>
</compile_context>

<pallas_src>
import math

import jax
import jax.numpy as jnp
from jax.experimental import pallas as pl
from jax.experimental.pallas import tpu as pltpu


# ----------------------------------------------------------------------------
# Kernel 1: fused StackGCNEncoder + dense1 + dense2  ->  node embeddings
# ----------------------------------------------------------------------------
def _encode_kernel(
    lnc_sup_ref,      # (S, n_lnc, n_dis)           bf16
    dis_sup_ref,      # (S, n_dis, n_lnc)           bf16
    x_stack_ref,      # (n_lnc + n_dis, input_dim)  bf16  (lnc rows on top)
    lnc_side_ref,     # (n_lnc, side_feat)          bf16
    dis_side_ref,     # (n_dis, side_feat)          bf16
    w_all_ref,        # (input_dim, S*hid_per)      bf16  concat of per-support W
    w1_lnc_ref,       # (side_feat, side_hid)       bf16
    b1_lnc_ref,       # (1, side_hid)               f32
    w1_dis_ref,       # (side_feat, side_hid)       bf16
    b1_dis_ref,       # (1, side_hid)               f32
    w2_lnc_gcn_ref,   # (S, hid_per, D)             bf16  per-support row-slabs of w2
    w2_lnc_side_ref,  # (side_hid, D)               bf16
    w2_dis_gcn_ref,   # (S, hid_per, D)             bf16
    w2_dis_side_ref,  # (side_hid, D)               bf16
    lnc_emb_ref,      # (n_lnc, D)                  f32  [out]
    dis_emb_ref,      # (n_dis, D)                  f32  [out]
):
    f32 = jnp.float32
    bf16 = jnp.bfloat16
    S = lnc_sup_ref.shape[0]
    n_lnc = lnc_sup_ref.shape[1]
    n_dis = dis_sup_ref.shape[1]
    hid_per = w2_lnc_gcn_ref.shape[1]
    D = w2_lnc_gcn_ref.shape[2]

    # ---- first encoder stage: ONE wide matmul across all supports -----------
    tmp_all = jnp.dot(x_stack_ref[...], w_all_ref[...],
                      preferred_element_type=f32)          # (N, S*hid_per) f32

    # ---- per-support propagation + ReLU, accumulated straight into dense2 ---
    # relu(concat_s A_s) @ W2_gcn == sum_s relu(A_s) @ W2_gcn_slab_s
    lnc_acc = jnp.zeros((n_lnc, D), f32)
    dis_acc = jnp.zeros((n_dis, D), f32)
    for s in range(S):                       # S small & static -> unrolled
        c0 = s * hid_per                     # lane slices are free once hid_per
        tmp_u = tmp_all[:n_lnc, c0:c0 + hid_per].astype(bf16)   # is 128-aligned
        tmp_v = tmp_all[n_lnc:, c0:c0 + hid_per].astype(bf16)
        lnc_h = jnp.maximum(
            jnp.dot(lnc_sup_ref[s], tmp_v, preferred_element_type=f32), 0.0)
        dis_h = jnp.maximum(
            jnp.dot(dis_sup_ref[s], tmp_u, preferred_element_type=f32), 0.0)
        lnc_acc += jnp.dot(lnc_h.astype(bf16), w2_lnc_gcn_ref[s],
                           preferred_element_type=f32)
        dis_acc += jnp.dot(dis_h.astype(bf16), w2_dis_gcn_ref[s],
                           preferred_element_type=f32)

    # ---- dense1 (side features, bias + ReLU) --------------------------------
    lnc_side_h = jnp.maximum(
        jnp.dot(lnc_side_ref[...], w1_lnc_ref[...], preferred_element_type=f32)
        + b1_lnc_ref[...], 0.0)
    dis_side_h = jnp.maximum(
        jnp.dot(dis_side_ref[...], w1_dis_ref[...], preferred_element_type=f32)
        + b1_dis_ref[...], 0.0)

    # ---- dense2 (split-w2 accumulation, no bias, identity activation) -------
    lnc_emb_ref[...] = lnc_acc + jnp.dot(
        lnc_side_h.astype(bf16), w2_lnc_side_ref[...], preferred_element_type=f32)
    dis_emb_ref[...] = dis_acc + jnp.dot(
        dis_side_h.astype(bf16), w2_dis_side_ref[...], preferred_element_type=f32)


# ----------------------------------------------------------------------------
# Kernel 2: decoder — SMEM-index gather + basis bilinear + classifier
# ----------------------------------------------------------------------------
def _decode_kernel(
    lnc_idx_ref,   # (E_pad,) int32  SMEM (scalar prefetch)
    dis_idx_ref,   # (E_pad,) int32  SMEM (scalar prefetch)
    lnc_emb_ref,   # (n_lnc, D) f32  (VMEM-resident across edge tiles)
    dis_emb_ref,   # (n_dis, D) f32
    q_ref,         # (B, D, D)  bf16 basis matrices
    wf_ref,        # (B, D, C_PAD) bf16  classifier row b broadcast over D, padded
    out_ref,       # (TE, C_PAD) f32  lane-dense logits tile
):
    f32 = jnp.float32
    bf16 = jnp.bfloat16
    TE = out_ref.shape[0]
    B = q_ref.shape[0]
    e0 = pl.program_id(0) * TE

    # -- real gather: per-row dynamic loads driven by SMEM indices ------------
    u_rows, v_rows = [], []
    for i in range(TE):                                   # TE small & static
        li = lnc_idx_ref[e0 + i]
        di = dis_idx_ref[e0 + i]
        u_rows.append(lnc_emb_ref[pl.ds(li, 1), :])       # (1, D)
        v_rows.append(dis_emb_ref[pl.ds(di, 1), :])       # (1, D)
    u = jnp.concatenate(u_rows, axis=0)                   # (TE, D) f32
    v = jnp.concatenate(v_rows, axis=0)                   # (TE, D) f32
    u_b = u.astype(bf16)

    # -- per-basis bilinear scores folded into the (padded) classifier --------
    # logits[e, c] = sum_b wc[b, c] * sum_j (u @ Q_b)[e, j] * v[e, j]
    acc = jnp.zeros(out_ref.shape, f32)
    for b in range(B):                                    # basis axis unrolled
        t = jnp.dot(u_b, q_ref[b], preferred_element_type=f32)      # (TE, D)
        prod = (t * v).astype(bf16)
        acc = acc + jnp.dot(prod, wf_ref[b], preferred_element_type=f32)
    out_ref[...] = acc


# ----------------------------------------------------------------------------
# Wrapper (layout plumbing only; fuses under jit)
# ----------------------------------------------------------------------------
def _nbytes(shape, dtype):
    return int(math.prod(shape)) * jnp.dtype(dtype).itemsize


def graph_matrix_completion_forward(params, lnc_supports, dis_supports,
                                    lnc_inputs, dis_inputs,
                                    lnc_side_inputs, dis_side_inputs,
                                    lnc_edge_idx, dis_edge_idx,
                                    *, edge_tile=8, num_class_pad=128):
    f32, bf16 = jnp.float32, jnp.bfloat16
    S, n_lnc, n_dis = lnc_supports.shape
    N = n_lnc + n_dis
    input_dim = lnc_inputs.shape[1]
    side_feat = lnc_side_inputs.shape[1]
    hid_per = params["w_gcn"].shape[2]
    gcn_hidden = S * hid_per
    side_hid = params["w1_lnc"].shape[1]
    B, D, _ = params["q_dec"].shape
    C = params["wc_dec"].shape[1]
    E = lnc_edge_idx.shape[0]

    # ---------------- encoder/dense operands (bf16 matmul inputs) ------------
    x_stack = jnp.concatenate([lnc_inputs, dis_inputs], axis=0).astype(bf16)
    w_all = jnp.transpose(params["w_gcn"], (1, 0, 2)).reshape(
        input_dim, gcn_hidden).astype(bf16)
    w2_lnc_gcn = params["w2_lnc"][:gcn_hidden].reshape(S, hid_per, D).astype(bf16)
    w2_lnc_side = params["w2_lnc"][gcn_hidden:].astype(bf16)
    w2_dis_gcn = params["w2_dis"][:gcn_hidden].reshape(S, hid_per, D).astype(bf16)
    w2_dis_side = params["w2_dis"][gcn_hidden:].astype(bf16)
    b1_lnc = params["b1_lnc"].reshape(1, side_hid).astype(f32)
    b1_dis = params["b1_dis"].reshape(1, side_hid).astype(f32)

    enc_in_bytes = (
        _nbytes((S, n_lnc, n_dis), bf16) + _nbytes((S, n_dis, n_lnc), bf16)
        + _nbytes((N, input_dim), bf16) + _nbytes((n_lnc, side_feat), bf16)
        + _nbytes((n_dis, side_feat), bf16) + _nbytes((input_dim, gcn_hidden), bf16)
        + 2 * (_nbytes((side_feat, side_hid), bf16) + _nbytes((1, side_hid), f32))
        + 2 * (_nbytes((S, hid_per, D), bf16) + _nbytes((side_hid, D), bf16)))
    enc_out_bytes = _nbytes((n_lnc, D), f32) + _nbytes((n_dis, D), f32)
    enc_flops = (2 * N * input_dim * gcn_hidden
                 + 4 * S * n_lnc * n_dis * hid_per
                 + 2 * N * gcn_hidden * D
                 + 2 * N * side_feat * side_hid
                 + 2 * N * side_hid * D)
    enc_vmem = max(4 << 20, min(100 << 20, 2 * (enc_in_bytes + enc_out_bytes) + (2 << 20)))

    lnc_embed, dis_embed = pl.pallas_call(
        _encode_kernel,
        out_shape=(jax.ShapeDtypeStruct((n_lnc, D), f32),
                   jax.ShapeDtypeStruct((n_dis, D), f32)),
        compiler_params=pltpu.CompilerParams(vmem_limit_bytes=int(enc_vmem)),
        cost_estimate=pl.CostEstimate(flops=int(enc_flops), transcendentals=0,
                                      bytes_accessed=int(enc_in_bytes + enc_out_bytes)),
    )(lnc_supports.astype(bf16), dis_supports.astype(bf16), x_stack,
      lnc_side_inputs.astype(bf16), dis_side_inputs.astype(bf16),
      w_all, params["w1_lnc"].astype(bf16), b1_lnc,
      params["w1_dis"].astype(bf16), b1_dis,
      w2_lnc_gcn, w2_lnc_side, w2_dis_gcn, w2_dis_side)

    # ---------------- decoder operands ---------------------------------------
    E_pad = ((E + edge_tile - 1) // edge_tile) * edge_tile
    lnc_idx = jnp.zeros((E_pad,), jnp.int32).at[:E].set(lnc_edge_idx.astype(jnp.int32))
    dis_idx = jnp.zeros((E_pad,), jnp.int32).at[:E].set(dis_edge_idx.astype(jnp.int32))
    wc_pad = jnp.zeros((B, num_class_pad), f32).at[:, :C].set(params["wc_dec"])
    w_fold = jnp.broadcast_to(wc_pad[:, None, :], (B, D, num_class_pad)).astype(bf16)
    q_bf = params["q_dec"].astype(bf16)

    n_tiles = E_pad // edge_tile
    dec_in_bytes = (_nbytes((n_lnc, D), f32) + _nbytes((n_dis, D), f32)
                    + _nbytes((B, D, D), bf16) + _nbytes((B, D, num_class_pad), bf16)
                    + 2 * _nbytes((E_pad,), jnp.int32))
    dec_out_bytes = _nbytes((E_pad, num_class_pad), f32)
    dec_flops = 2 * E_pad * B * (D * D + D * num_class_pad)
    dec_vmem = max(4 << 20, min(100 << 20, 2 * (dec_in_bytes + dec_out_bytes) + (2 << 20)))

    grid_spec = pltpu.PrefetchScalarGridSpec(
        num_scalar_prefetch=2,
        grid=(n_tiles,),
        in_specs=[
            # embeddings stay resident in VMEM across all edge tiles
            pl.BlockSpec((n_lnc, D), lambda t, li, di: (0, 0)),
            pl.BlockSpec((n_dis, D), lambda t, li, di: (0, 0)),
            pl.BlockSpec((B, D, D), lambda t, li, di: (0, 0, 0)),
            pl.BlockSpec((B, D, num_class_pad), lambda t, li, di: (0, 0, 0)),
        ],
        out_specs=pl.BlockSpec((edge_tile, num_class_pad), lambda t, li, di: (t, 0)),
    )

    logits_pad = pl.pallas_call(
        _decode_kernel,
        grid_spec=grid_spec,
        out_shape=jax.ShapeDtypeStruct((E_pad, num_class_pad), f32),
        compiler_params=pltpu.CompilerParams(
            dimension_semantics=("parallel",),
            vmem_limit_bytes=int(dec_vmem)),
        cost_estimate=pl.CostEstimate(flops=int(dec_flops), transcendentals=0,
                                      bytes_accessed=int(dec_in_bytes + dec_out_bytes)),
    )(lnc_idx, dis_idx, lnc_embed, dis_embed, q_bf, w_fold)

    return logits_pad[:E, :C]


# ----------------------------------------------------------------------------
# Pure-JAX reference (unfused, f32) for correctness validation
# ----------------------------------------------------------------------------
def _reference_forward(params, lnc_supports, dis_supports, lnc_inputs, dis_inputs,
                       lnc_side_inputs, dis_side_inputs, lnc_edge_idx, dis_edge_idx):
    S = lnc_supports.shape[0]
    w = params["w_gcn"]
    lnc_cols, dis_cols = [], []
    for s in range(S):
        tmp_u = lnc_inputs @ w[s]
        tmp_v = dis_inputs @ w[s]
        lnc_cols.append(lnc_supports[s] @ tmp_v)
        dis_cols.append(dis_supports[s] @ tmp_u)
    lnc_gcn = jax.nn.relu(jnp.concatenate(lnc_cols, axis=1))
    dis_gcn = jax.nn.relu(jnp.concatenate(dis_cols, axis=1))
    lnc_side = jax.nn.relu(lnc_side_inputs @ params["w1_lnc"] + params["b1_lnc"])
    dis_side = jax.nn.relu(dis_side_inputs @ params["w1_dis"] + params["b1_dis"])
    lnc_feat = jnp.concatenate([lnc_gcn, lnc_side], axis=1)
    dis_feat = jnp.concatenate([dis_gcn, dis_side], axis=1)
    lnc_embed = lnc_feat @ params["w2_lnc"]
    dis_embed = dis_feat @ params["w2_dis"]
    u = lnc_embed[lnc_edge_idx]
    v = dis_embed[dis_edge_idx]
    q = params["q_dec"]
    scores = jnp.stack(
        [jnp.sum((u @ q[b]) * v, axis=1) for b in range(q.shape[0])], axis=1)
    return scores @ params["wc_dec"]


def init_params(key, input_dim, side_feat_dim, gcn_hidden_dim, side_hidden_dim,
                encode_hidden_dim, num_support=2, num_classes=2, num_basis=2):
    ks = jax.random.split(key, 10)
    s = 0.1
    hid_per = gcn_hidden_dim // num_support
    feat_dim = gcn_hidden_dim + side_hidden_dim
    return {
        # StackGCNEncoder weight: (num_support, input_dim, gcn_hidden // num_support)
        "w_gcn":  s * jax.random.normal(ks[0], (num_support, input_dim, hid_per), jnp.float32),
        # dense1 (separate lnc / dis linears, with bias)
        "w1_lnc": s * jax.random.normal(ks[1], (side_feat_dim, side_hidden_dim), jnp.float32),
        "b1_lnc": s * jax.random.normal(ks[2], (side_hidden_dim,), jnp.float32),
        "w1_dis": s * jax.random.normal(ks[3], (side_feat_dim, side_hidden_dim), jnp.float32),
        "b1_dis": s * jax.random.normal(ks[4], (side_hidden_dim,), jnp.float32),
        # dense2 (no bias, identity activation)
        "w2_lnc": s * jax.random.normal(ks[5], (feat_dim, encode_hidden_dim), jnp.float32),
        "w2_dis": s * jax.random.normal(ks[6], (feat_dim, encode_hidden_dim), jnp.float32),
        # decoder basis matrices + classifier
        "q_dec":  s * jax.random.normal(ks[7], (num_basis, encode_hidden_dim, encode_hidden_dim), jnp.float32),
        "wc_dec": s * jax.random.normal(ks[8], (num_basis, num_classes), jnp.float32),
    }


if __name__ == "__main__":
    key = jax.random.PRNGKey(0)
    kd, kp = jax.random.split(key)
    dk = jax.random.split(kd, 6)

    # small shapes consistent with the module
    num_lnc, num_dis = 24, 16
    input_dim = num_lnc + num_dis            # one-hot identity features
    side_feat_dim = 24
    gcn_hidden_dim = 32                      # divisible by num_support
    side_hidden_dim = 16
    encode_hidden_dim = 32
    num_support, num_classes, num_basis = 2, 2, 2
    num_edges = 8

    lnc_supports = jax.random.uniform(dk[0], (num_support, num_lnc, num_dis), jnp.float32)
    dis_supports = jnp.transpose(lnc_supports, (0, 2, 1))
    lnc_inputs = jnp.concatenate(
        [jnp.eye(num_lnc, dtype=jnp.float32), jnp.zeros((num_lnc, num_dis), jnp.float32)], axis=1)
    dis_inputs = jnp.concatenate(
        [jnp.zeros((num_dis, num_lnc), jnp.float32), jnp.eye(num_dis, dtype=jnp.float32)], axis=1)
    lnc_side_inputs = jax.random.normal(dk[1], (num_lnc, side_feat_dim), jnp.float32)
    dis_side_inputs = jax.random.normal(dk[2], (num_dis, side_feat_dim), jnp.float32)
    lnc_edge_idx = jax.random.randint(dk[3], (num_edges,), 0, num_lnc, jnp.int32)
    dis_edge_idx = jax.random.randint(dk[4], (num_edges,), 0, num_dis, jnp.int32)

    params = init_params(kp, input_dim, side_feat_dim, gcn_hidden_dim,
                         side_hidden_dim, encode_hidden_dim,
                         num_support, num_classes, num_basis)

    fwd = jax.jit(graph_matrix_completion_forward)
    edge_logits = fwd(params, lnc_supports, dis_supports, lnc_inputs, dis_inputs,
                      lnc_side_inputs, dis_side_inputs, lnc_edge_idx, dis_edge_idx)
    jax.block_until_ready(edge_logits)

    ref = _reference_forward(params, lnc_supports, dis_supports, lnc_inputs,
                             dis_inputs, lnc_side_inputs, dis_side_inputs,
                             lnc_edge_idx, dis_edge_idx)

    assert edge_logits.shape == (num_edges, num_classes)
    assert bool(jnp.all(jnp.isfinite(edge_logits)))
    # bf16 matmul operands (f32 accumulation) -> loosened tolerance vs f32 ref
    assert bool(jnp.allclose(edge_logits, ref, rtol=5e-2, atol=2e-3)), \
        "fused Pallas kernels mismatch vs pure-JAX reference"
    print("KERNEL_OK")
</pallas_src>

<mosaic_0001>
module attributes {stable_mosaic.version = 11 : i64} {
  func.func @_encode_kernel(%arg0: memref<2x24x16xbf16, #tpu.memory_space<vmem>>, %arg1: memref<2x16x24xbf16, #tpu.memory_space<vmem>>, %arg2: memref<40x40xbf16, #tpu.memory_space<vmem>>, %arg3: memref<24x24xbf16, #tpu.memory_space<vmem>>, %arg4: memref<16x24xbf16, #tpu.memory_space<vmem>>, %arg5: memref<40x32xbf16, #tpu.memory_space<vmem>>, %arg6: memref<24x16xbf16, #tpu.memory_space<vmem>>, %arg7: memref<1x16xf32, #tpu.memory_space<vmem>>, %arg8: memref<24x16xbf16, #tpu.memory_space<vmem>>, %arg9: memref<1x16xf32, #tpu.memory_space<vmem>>, %arg10: memref<2x16x32xbf16, #tpu.memory_space<vmem>>, %arg11: memref<16x32xbf16, #tpu.memory_space<vmem>>, %arg12: memref<2x16x32xbf16, #tpu.memory_space<vmem>>, %arg13: memref<16x32xbf16, #tpu.memory_space<vmem>>, %arg14: memref<24x32xf32, #tpu.memory_space<vmem>>, %arg15: memref<16x32xf32, #tpu.memory_space<vmem>>) attributes {dimension_semantics = [], scalar_prefetch = 0 : i64, scratch_operands = 0 : i64, tpu.core_type = #tpu.core_type<tc>} {
    %c0 = arith.constant 0 : index
    %c0_0 = arith.constant 0 : index
    %0 = vector.load %arg2[%c0, %c0_0] : memref<40x40xbf16, #tpu.memory_space<vmem>>, vector<40x40xbf16>
    %c0_1 = arith.constant 0 : index
    %c0_2 = arith.constant 0 : index
    %1 = vector.load %arg5[%c0_1, %c0_2] : memref<40x32xbf16, #tpu.memory_space<vmem>>, vector<40x32xbf16>
    %cst = arith.constant dense<0.000000e+00> : vector<40x32xf32>
    %2 = tpu.matmul %0, %1, %cst {dimension_numbers = #tpu.dot_dimension_numbers<[1], [0], [0], [1], [0, 0, 1, 1], [], []>} : vector<40x40xbf16>, vector<40x32xbf16>, vector<40x32xf32> -> vector<40x32xf32>
    %cst_3 = arith.constant 0.000000e+00 : f32
    %3 = vector.broadcast %cst_3 : f32 to vector<24x32xf32>
    %cst_4 = arith.constant 0.000000e+00 : f32
    %4 = vector.broadcast %cst_4 : f32 to vector<16x32xf32>
    %5 = vector.extract_strided_slice %2 {offsets = [0, 0], sizes = [24, 16], strides = [1, 1]} : vector<40x32xf32> to vector<24x16xf32>
    %6 = arith.truncf %5 : vector<24x16xf32> to vector<24x16xbf16>
    %7 = vector.extract_strided_slice %2 {offsets = [24, 0], sizes = [16, 16], strides = [1, 1]} : vector<40x32xf32> to vector<16x16xf32>
    %8 = arith.truncf %7 : vector<16x16xf32> to vector<16x16xbf16>
    %c0_5 = arith.constant 0 : index
    %c0_6 = arith.constant 0 : index
    %c0_7 = arith.constant 0 : index
    %9 = vector.load %arg0[%c0_5, %c0_6, %c0_7] : memref<2x24x16xbf16, #tpu.memory_space<vmem>>, vector<1x24x16xbf16>
    %10 = vector.shape_cast %9 : vector<1x24x16xbf16> to vector<24x16xbf16>
    %cst_8 = arith.constant dense<0.000000e+00> : vector<24x16xf32>
    %11 = tpu.matmul %10, %8, %cst_8 {dimension_numbers = #tpu.dot_dimension_numbers<[1], [0], [0], [1], [0, 0, 1, 1], [], []>} : vector<24x16xbf16>, vector<16x16xbf16>, vector<24x16xf32> -> vector<24x16xf32>
    %cst_9 = arith.constant 0.000000e+00 : f32
    %12 = vector.broadcast %cst_9 : f32 to vector<24x16xf32>
    %13 = arith.maximumf %11, %12 : vector<24x16xf32>
    %c0_10 = arith.constant 0 : index
    %c0_11 = arith.constant 0 : index
    %c0_12 = arith.constant 0 : index
    %14 = vector.load %arg1[%c0_10, %c0_11, %c0_12] : memref<2x16x24xbf16, #tpu.memory_space<vmem>>, vector<1x16x24xbf16>
    %15 = vector.shape_cast %14 : vector<1x16x24xbf16> to vector<16x24xbf16>
    %cst_13 = arith.constant dense<0.000000e+00> : vector<16x16xf32>
    %16 = tpu.matmul %15, %6, %cst_13 {dimension_numbers = #tpu.dot_dimension_numbers<[1], [0], [0], [1], [0, 0, 1, 1], [], []>} : vector<16x24xbf16>, vector<24x16xbf16>, vector<16x16xf32> -> vector<16x16xf32>
    %cst_14 = arith.constant 0.000000e+00 : f32
    %17 = vector.broadcast %cst_14 : f32 to vector<16x16xf32>
    %18 = arith.maximumf %16, %17 : vector<16x16xf32>
    %19 = arith.truncf %13 : vector<24x16xf32> to vector<24x16xbf16>
    %c0_15 = arith.constant 0 : index
    %c0_16 = arith.constant 0 : index
    %c0_17 = arith.constant 0 : index
    %20 = vector.load %arg10[%c0_15, %c0_16, %c0_17] : memref<2x16x32xbf16, #tpu.memory_space<vmem>>, vector<1x16x32xbf16>
    %21 = vector.shape_cast %20 : vector<1x16x32xbf16> to vector<16x32xbf16>
    %cst_18 = arith.constant dense<0.000000e+00> : vector<24x32xf32>
    %22 = tpu.matmul %19, %21, %cst_18 {dimension_numbers = #tpu.dot_dimension_numbers<[1], [0], [0], [1], [0, 0, 1, 1], [], []>} : vector<24x16xbf16>, vector<16x32xbf16>, vector<24x32xf32> -> vector<24x32xf32>
    %23 = arith.addf %3, %22 : vector<24x32xf32>
    %24 = arith.truncf %18 : vector<16x16xf32> to vector<16x16xbf16>
    %c0_19 = arith.constant 0 : index
    %c0_20 = arith.constant 0 : index
    %c0_21 = arith.constant 0 : index
    %25 = vector.load %arg12[%c0_19, %c0_20, %c0_21] : memref<2x16x32xbf16, #tpu.memory_space<vmem>>, vector<1x16x32xbf16>
    %26 = vector.shape_cast %25 : vector<1x16x32xbf16> to vector<16x32xbf16>
    %cst_22 = arith.constant dense<0.000000e+00> : vector<16x32xf32>
    %27 = tpu.matmul %24, %26, %cst_22 {dimension_numbers = #tpu.dot_dimension_numbers<[1], [0], [0], [1], [0, 0, 1, 1], [], []>} : vector<16x16xbf16>, vector<16x32xbf16>, vector<16x32xf32> -> vector<16x32xf32>
    %28 = arith.addf %4, %27 : vector<16x32xf32>
    %29 = vector.extract_strided_slice %2 {offsets = [0, 16], sizes = [24, 16], strides = [1, 1]} : vector<40x32xf32> to vector<24x16xf32>
    %30 = arith.truncf %29 : vector<24x16xf32> to vector<24x16xbf16>
    %31 = vector.extract_strided_slice %2 {offsets = [24, 16], sizes = [16, 16], strides = [1, 1]} : vector<40x32xf32> to vector<16x16xf32>
    %32 = arith.truncf %31 : vector<16x16xf32> to vector<16x16xbf16>
    %c1 = arith.constant 1 : index
    %c0_23 = arith.constant 0 : index
    %c0_24 = arith.constant 0 : index
    %33 = vector.load %arg0[%c1, %c0_23, %c0_24] : memref<2x24x16xbf16, #tpu.memory_space<vmem>>, vector<1x24x16xbf16>
    %34 = vector.shape_cast %33 : vector<1x24x16xbf16> to vector<24x16xbf16>
    %cst_25 = arith.constant dense<0.000000e+00> : vector<24x16xf32>
    %35 = tpu.matmul %34, %32, %cst_25 {dimension_numbers = #tpu.dot_dimension_numbers<[1], [0], [0], [1], [0, 0, 1, 1], [], []>} : vector<24x16xbf16>, vector<16x16xbf16>, vector<24x16xf32> -> vector<24x16xf32>
    %cst_26 = arith.constant 0.000000e+00 : f32
    %36 = vector.broadcast %cst_26 : f32 to vector<24x16xf32>
    %37 = arith.maximumf %35, %36 : vector<24x16xf32>
    %c1_27 = arith.constant 1 : index
    %c0_28 = arith.constant 0 : index
    %c0_29 = arith.constant 0 : index
    %38 = vector.load %arg1[%c1_27, %c0_28, %c0_29] : memref<2x16x24xbf16, #tpu.memory_space<vmem>>, vector<1x16x24xbf16>
    %39 = vector.shape_cast %38 : vector<1x16x24xbf16> to vector<16x24xbf16>
    %cst_30 = arith.constant dense<0.000000e+00> : vector<16x16xf32>
    %40 = tpu.matmul %39, %30, %cst_30 {dimension_numbers = #tpu.dot_dimension_numbers<[1], [0], [0], [1], [0, 0, 1, 1], [], []>} : vector<16x24xbf16>, vector<24x16xbf16>, vector<16x16xf32> -> vector<16x16xf32>
    %cst_31 = arith.constant 0.000000e+00 : f32
    %41 = vector.broadcast %cst_31 : f32 to vector<16x16xf32>
    %42 = arith.maximumf %40, %41 : vector<16x16xf32>
    %43 = arith.truncf %37 : vector<24x16xf32> to vector<24x16xbf16>
    %c1_32 = arith.constant 1 : index
    %c0_33 = arith.constant 0 : index
    %c0_34 = arith.constant 0 : index
    %44 = vector.load %arg10[%c1_32, %c0_33, %c0_34] : memref<2x16x32xbf16, #tpu.memory_space<vmem>>, vector<1x16x32xbf16>
    %45 = vector.shape_cast %44 : vector<1x16x32xbf16> to vector<16x32xbf16>
    %cst_35 = arith.constant dense<0.000000e+00> : vector<24x32xf32>
    %46 = tpu.matmul %43, %45, %cst_35 {dimension_numbers = #tpu.dot_dimension_numbers<[1], [0], [0], [1], [0, 0, 1, 1], [], []>} : vector<24x16xbf16>, vector<16x32xbf16>, vector<24x32xf32> -> vector<24x32xf32>
    %47 = arith.addf %23, %46 : vector<24x32xf32>
    %48 = arith.truncf %42 : vector<16x16xf32> to vector<16x16xbf16>
    %c1_36 = arith.constant 1 : index
    %c0_37 = arith.constant 0 : index
    %c0_38 = arith.constant 0 : index
    %49 = vector.load %arg12[%c1_36, %c0_37, %c0_38] : memref<2x16x32xbf16, #tpu.memory_space<vmem>>, vector<1x16x32xbf16>
    %50 = vector.shape_cast %49 : vector<1x16x32xbf16> to vector<16x32xbf16>
    %cst_39 = arith.constant dense<0.000000e+00> : vector<16x32xf32>
    %51 = tpu.matmul %48, %50, %cst_39 {dimension_numbers = #tpu.dot_dimension_numbers<[1], [0], [0], [1], [0, 0, 1, 1], [], []>} : vector<16x16xbf16>, vector<16x32xbf16>, vector<16x32xf32> -> vector<16x32xf32>
    %52 = arith.addf %28, %51 : vector<16x32xf32>
    %c0_40 = arith.constant 0 : index
    %c0_41 = arith.constant 0 : index
    %53 = vector.load %arg3[%c0_40, %c0_41] : memref<24x24xbf16, #tpu.memory_space<vmem>>, vector<24x24xbf16>
    %c0_42 = arith.constant 0 : index
    %c0_43 = arith.constant 0 : index
    %54 = vector.load %arg6[%c0_42, %c0_43] : memref<24x16xbf16, #tpu.memory_space<vmem>>, vector<24x16xbf16>
    %cst_44 = arith.constant dense<0.000000e+00> : vector<24x16xf32>
    %55 = tpu.matmul %53, %54, %cst_44 {dimension_numbers = #tpu.dot_dimension_numbers<[1], [0], [0], [1], [0, 0, 1, 1], [], []>} : vector<24x24xbf16>, vector<24x16xbf16>, vector<24x16xf32> -> vector<24x16xf32>
    %c0_45 = arith.constant 0 : index
    %c0_46 = arith.constant 0 : index
    %56 = vector.load %arg7[%c0_45, %c0_46] : memref<1x16xf32, #tpu.memory_space<vmem>>, vector<1x16xf32>
    %57 = vector.broadcast %56 : vector<1x16xf32> to vector<24x16xf32>
    %58 = arith.addf %55, %57 : vector<24x16xf32>
    %cst_47 = arith.constant 0.000000e+00 : f32
    %59 = vector.broadcast %cst_47 : f32 to vector<24x16xf32>
    %60 = arith.maximumf %58, %59 : vector<24x16xf32>
    %c0_48 = arith.constant 0 : index
    %c0_49 = arith.constant 0 : index
    %61 = vector.load %arg4[%c0_48, %c0_49] : memref<16x24xbf16, #tpu.memory_space<vmem>>, vector<16x24xbf16>
    %c0_50 = arith.constant 0 : index
    %c0_51 = arith.constant 0 : index
    %62 = vector.load %arg8[%c0_50, %c0_51] : memref<24x16xbf16, #tpu.memory_space<vmem>>, vector<24x16xbf16>
    %cst_52 = arith.constant dense<0.000000e+00> : vector<16x16xf32>
    %63 = tpu.matmul %61, %62, %cst_52 {dimension_numbers = #tpu.dot_dimension_numbers<[1], [0], [0], [1], [0, 0, 1, 1], [], []>} : vector<16x24xbf16>, vector<24x16xbf16>, vector<16x16xf32> -> vector<16x16xf32>
    %c0_53 = arith.constant 0 : index
    %c0_54 = arith.constant 0 : index
    %64 = vector.load %arg9[%c0_53, %c0_54] : memref<1x16xf32, #tpu.memory_space<vmem>>, vector<1x16xf32>
    %65 = vector.broadcast %64 : vector<1x16xf32> to vector<16x16xf32>
    %66 = arith.addf %63, %65 : vector<16x16xf32>
    %cst_55 = arith.constant 0.000000e+00 : f32
    %67 = vector.broadcast %cst_55 : f32 to vector<16x16xf32>
    %68 = arith.maximumf %66, %67 : vector<16x16xf32>
    %69 = arith.truncf %60 : vector<24x16xf32> to vector<24x16xbf16>
    %c0_56 = arith.constant 0 : index
    %c0_57 = arith.constant 0 : index
    %70 = vector.load %arg11[%c0_56, %c0_57] : memref<16x32xbf16, #tpu.memory_space<vmem>>, vector<16x32xbf16>
    %cst_58 = arith.constant dense<0.000000e+00> : vector<24x32xf32>
    %71 = tpu.matmul %69, %70, %cst_58 {dimension_numbers = #tpu.dot_dimension_numbers<[1], [0], [0], [1], [0, 0, 1, 1], [], []>} : vector<24x16xbf16>, vector<16x32xbf16>, vector<24x32xf32> -> vector<24x32xf32>
    %72 = arith.addf %47, %71 : vector<24x32xf32>
    %c0_59 = arith.constant 0 : index
    %c0_60 = arith.constant 0 : index
    %73 = vector.load %arg14[%c0_59, %c0_60] : memref<24x32xf32, #tpu.memory_space<vmem>>, vector<24x32xf32>
    tpu.vector_store %arg14[%c0_59, %c0_60], %72 {strides = array<i32>} : memref<24x32xf32, #tpu.memory_space<vmem>>, vector<24x32xf32>,
    %74 = arith.truncf %68 : vector<16x16xf32> to vector<16x16xbf16>
    %c0_61 = arith.constant 0 : index
    %c0_62 = arith.constant 0 : index
    %75 = vector.load %arg13[%c0_61, %c0_62] : memref<16x32xbf16, #tpu.memory_space<vmem>>, vector<16x32xbf16>
    %cst_63 = arith.constant dense<0.000000e+00> : vector<16x32xf32>
    %76 = tpu.matmul %74, %75, %cst_63 {dimension_numbers = #tpu.dot_dimension_numbers<[1], [0], [0], [1], [0, 0, 1, 1], [], []>} : vector<16x16xbf16>, vector<16x32xbf16>, vector<16x32xf32> -> vector<16x32xf32>
    %77 = arith.addf %52, %76 : vector<16x32xf32>
    %c0_64 = arith.constant 0 : index
    %c0_65 = arith.constant 0 : index
    %78 = vector.load %arg15[%c0_64, %c0_65] : memref<16x32xf32, #tpu.memory_space<vmem>>, vector<16x32xf32>
    tpu.vector_store %arg15[%c0_64, %c0_65], %77 {strides = array<i32>} : memref<16x32xf32, #tpu.memory_space<vmem>>, vector<16x32xf32>,
    return
  }
}

module attributes {stable_mosaic.version = 11 : i64} {
  func.func @_decode_kernel(%arg0: i32, %arg1: memref<8xi32, #tpu.memory_space<smem>>, %arg2: memref<8xi32, #tpu.memory_space<smem>>, %arg3: memref<24x32xf32, #tpu.memory_space<vmem>>, %arg4: memref<16x32xf32, #tpu.memory_space<vmem>>, %arg5: memref<2x32x32xbf16, #tpu.memory_space<vmem>>, %arg6: memref<2x32x128xbf16, #tpu.memory_space<vmem>>, %arg7: memref<8x128xf32, #tpu.memory_space<vmem>>) attributes {dimension_semantics = [#tpu.dimension_semantics<parallel>], iteration_bounds = array<i64: 1>, scalar_prefetch = 2 : i64, scratch_operands = 0 : i64, tpu.core_type = #tpu.core_type<tc>, window_params = [{pipeline_mode = #tpu.pipeline_mode<synchronous>, transform_indices = @transform_0, window_bounds = array<i64: 24, 32>}, {pipeline_mode = #tpu.pipeline_mode<synchronous>, transform_indices = @transform_1, window_bounds = array<i64: 16, 32>}, {pipeline_mode = #tpu.pipeline_mode<synchronous>, transform_indices = @transform_2, window_bounds = array<i64: 2, 32, 32>}, {pipeline_mode = #tpu.pipeline_mode<synchronous>, transform_indices = @transform_3, window_bounds = array<i64: 2, 32, 128>}, {transform_indices = @transform_4, window_bounds = array<i64: 8, 128>}]} {
    %c8_i32 = arith.constant 8 : i32
    %0 = arith.muli %arg0, %c8_i32 : i32
    %c0_i32 = arith.constant 0 : i32
    %1 = arith.addi %0, %c0_i32 : i32
    %2 = arith.index_cast %1 : i32 to index
    %3 = memref.load %arg1[%2] : memref<8xi32, #tpu.memory_space<smem>>
    %c0_i32_0 = arith.constant 0 : i32
    %4 = arith.addi %0, %c0_i32_0 : i32
    %5 = arith.index_cast %4 : i32 to index
    %6 = memref.load %arg2[%5] : memref<8xi32, #tpu.memory_space<smem>>
    %7 = arith.index_cast %3 : i32 to index
    %c0 = arith.constant 0 : index
    %8 = vector.load %arg3[%7, %c0] : memref<24x32xf32, #tpu.memory_space<vmem>>, vector<1x32xf32>
    %9 = arith.index_cast %6 : i32 to index
    %c0_1 = arith.constant 0 : index
    %10 = vector.load %arg4[%9, %c0_1] : memref<16x32xf32, #tpu.memory_space<vmem>>, vector<1x32xf32>
    %c1_i32 = arith.constant 1 : i32
    %11 = arith.addi %0, %c1_i32 : i32
    %12 = arith.index_cast %11 : i32 to index
    %13 = memref.load %arg1[%12] : memref<8xi32, #tpu.memory_space<smem>>
    %c1_i32_2 = arith.constant 1 : i32
    %14 = arith.addi %0, %c1_i32_2 : i32
    %15 = arith.index_cast %14 : i32 to index
    %16 = memref.load %arg2[%15] : memref<8xi32, #tpu.memory_space<smem>>
    %17 = arith.index_cast %13 : i32 to index
    %c0_3 = arith.constant 0 : index
    %18 = vector.load %arg3[%17, %c0_3] : memref<24x32xf32, #tpu.memory_space<vmem>>, vector<1x32xf32>
    %19 = arith.index_cast %16 : i32 to index
    %c0_4 = arith.constant 0 : index
    %20 = vector.load %arg4[%19, %c0_4] : memref<16x32xf32, #tpu.memory_space<vmem>>, vector<1x32xf32>
    %c2_i32 = arith.constant 2 : i32
    %21 = arith.addi %0, %c2_i32 : i32
    %22 = arith.index_cast %21 : i32 to index
    %23 = memref.load %arg1[%22] : memref<8xi32, #tpu.memory_space<smem>>
    %c2_i32_5 = arith.constant 2 : i32
    %24 = arith.addi %0, %c2_i32_5 : i32
    %25 = arith.index_cast %24 : i32 to index
    %26 = memref.load %arg2[%25] : memref<8xi32, #tpu.memory_space<smem>>
    %27 = arith.index_cast %23 : i32 to index
    %c0_6 = arith.constant 0 : index
    %28 = vector.load %arg3[%27, %c0_6] : memref<24x32xf32, #tpu.memory_space<vmem>>, vector<1x32xf32>
    %29 = arith.index_cast %26 : i32 to index
    %c0_7 = arith.constant 0 : index
    %30 = vector.load %arg4[%29, %c0_7] : memref<16x32xf32, #tpu.memory_space<vmem>>, vector<1x32xf32>
    %c3_i32 = arith.constant 3 : i32
    %31 = arith.addi %0, %c3_i32 : i32
    %32 = arith.index_cast %31 : i32 to index
    %33 = memref.load %arg1[%32] : memref<8xi32, #tpu.memory_space<smem>>
    %c3_i32_8 = arith.constant 3 : i32
    %34 = arith.addi %0, %c3_i32_8 : i32
    %35 = arith.index_cast %34 : i32 to index
    %36 = memref.load %arg2[%35] : memref<8xi32, #tpu.memory_space<smem>>
    %37 = arith.index_cast %33 : i32 to index
    %c0_9 = arith.constant 0 : index
    %38 = vector.load %arg3[%37, %c0_9] : memref<24x32xf32, #tpu.memory_space<vmem>>, vector<1x32xf32>
    %39 = arith.index_cast %36 : i32 to index
    %c0_10 = arith.constant 0 : index
    %40 = vector.load %arg4[%39, %c0_10] : memref<16x32xf32, #tpu.memory_space<vmem>>, vector<1x32xf32>
    %c4_i32 = arith.constant 4 : i32
    %41 = arith.addi %0, %c4_i32 : i32
    %42 = arith.index_cast %41 : i32 to index
    %43 = memref.load %arg1[%42] : memref<8xi32, #tpu.memory_space<smem>>
    %c4_i32_11 = arith.constant 4 : i32
    %44 = arith.addi %0, %c4_i32_11 : i32
    %45 = arith.index_cast %44 : i32 to index
    %46 = memref.load %arg2[%45] : memref<8xi32, #tpu.memory_space<smem>>
    %47 = arith.index_cast %43 : i32 to index
    %c0_12 = arith.constant 0 : index
    %48 = vector.load %arg3[%47, %c0_12] : memref<24x32xf32, #tpu.memory_space<vmem>>, vector<1x32xf32>
    %49 = arith.index_cast %46 : i32 to index
    %c0_13 = arith.constant 0 : index
    %50 = vector.load %arg4[%49, %c0_13] : memref<16x32xf32, #tpu.memory_space<vmem>>, vector<1x32xf32>
    %c5_i32 = arith.constant 5 : i32
    %51 = arith.addi %0, %c5_i32 : i32
    %52 = arith.index_cast %51 : i32 to index
    %53 = memref.load %arg1[%52] : memref<8xi32, #tpu.memory_space<smem>>
    %c5_i32_14 = arith.constant 5 : i32
    %54 = arith.addi %0, %c5_i32_14 : i32
    %55 = arith.index_cast %54 : i32 to index
    %56 = memref.load %arg2[%55] : memref<8xi32, #tpu.memory_space<smem>>
    %57 = arith.index_cast %53 : i32 to index
    %c0_15 = arith.constant 0 : index
    %58 = vector.load %arg3[%57, %c0_15] : memref<24x32xf32, #tpu.memory_space<vmem>>, vector<1x32xf32>
    %59 = arith.index_cast %56 : i32 to index
    %c0_16 = arith.constant 0 : index
    %60 = vector.load %arg4[%59, %c0_16] : memref<16x32xf32, #tpu.memory_space<vmem>>, vector<1x32xf32>
    %c6_i32 = arith.constant 6 : i32
    %61 = arith.addi %0, %c6_i32 : i32
    %62 = arith.index_cast %61 : i32 to index
    %63 = memref.load %arg1[%62] : memref<8xi32, #tpu.memory_space<smem>>
    %c6_i32_17 = arith.constant 6 : i32
    %64 = arith.addi %0, %c6_i32_17 : i32
    %65 = arith.index_cast %64 : i32 to index
    %66 = memref.load %arg2[%65] : memref<8xi32, #tpu.memory_space<smem>>
    %67 = arith.index_cast %63 : i32 to index
    %c0_18 = arith.constant 0 : index
    %68 = vector.load %arg3[%67, %c0_18] : memref<24x32xf32, #tpu.memory_space<vmem>>, vector<1x32xf32>
    %69 = arith.index_cast %66 : i32 to index
    %c0_19 = arith.constant 0 : index
    %70 = vector.load %arg4[%69, %c0_19] : memref<16x32xf32, #tpu.memory_space<vmem>>, vector<1x32xf32>
    %c7_i32 = arith.constant 7 : i32
    %71 = arith.addi %0, %c7_i32 : i32
    %72 = arith.index_cast %71 : i32 to index
    %73 = memref.load %arg1[%72] : memref<8xi32, #tpu.memory_space<smem>>
    %c7_i32_20 = arith.constant 7 : i32
    %74 = arith.addi %0, %c7_i32_20 : i32
    %75 = arith.index_cast %74 : i32 to index
    %76 = memref.load %arg2[%75] : memref<8xi32, #tpu.memory_space<smem>>
    %77 = arith.index_cast %73 : i32 to index
    %c0_21 = arith.constant 0 : index
    %78 = vector.load %arg3[%77, %c0_21] : memref<24x32xf32, #tpu.memory_space<vmem>>, vector<1x32xf32>
    %79 = arith.index_cast %76 : i32 to index
    %c0_22 = arith.constant 0 : index
    %80 = vector.load %arg4[%79, %c0_22] : memref<16x32xf32, #tpu.memory_space<vmem>>, vector<1x32xf32>
    %81 = tpu.concatenate %8, %18, %28, %38, %48, %58, %68, %78 in 0 : vector<1x32xf32>, vector<1x32xf32>, vector<1x32xf32>, vector<1x32xf32>, vector<1x32xf32>, vector<1x32xf32>, vector<1x32xf32>, vector<1x32xf32> -> vector<8x32xf32>
    %82 = tpu.concatenate %10, %20, %30, %40, %50, %60, %70, %80 in 0 : vector<1x32xf32>, vector<1x32xf32>, vector<1x32xf32>, vector<1x32xf32>, vector<1x32xf32>, vector<1x32xf32>, vector<1x32xf32>, vector<1x32xf32> -> vector<8x32xf32>
    %83 = arith.truncf %81 : vector<8x32xf32> to vector<8x32xbf16>
    %cst = arith.constant 0.000000e+00 : f32
    %84 = vector.broadcast %cst : f32 to vector<8x128xf32>
    %c0_23 = arith.constant 0 : index
    %c0_24 = arith.constant 0 : index
    %c0_25 = arith.constant 0 : index
    %85 = vector.load %arg5[%c0_23, %c0_24, %c0_25] : memref<2x32x32xbf16, #tpu.memory_space<vmem>>, vector<1x32x32xbf16>
    %86 = vector.shape_cast %85 : vector<1x32x32xbf16> to vector<32x32xbf16>
    %cst_26 = arith.constant dense<0.000000e+00> : vector<8x32xf32>
    %87 = tpu.matmul %83, %86, %cst_26 {dimension_numbers = #tpu.dot_dimension_numbers<[1], [0], [0], [1], [0, 0, 1, 1], [], []>} : vector<8x32xbf16>, vector<32x32xbf16>, vector<8x32xf32> -> vector<8x32xf32>
    %88 = arith.mulf %87, %82 : vector<8x32xf32>
    %89 = arith.truncf %88 : vector<8x32xf32> to vector<8x32xbf16>
    %c0_27 = arith.constant 0 : index
    %c0_28 = arith.constant 0 : index
    %c0_29 = arith.constant 0 : index
    %90 = vector.load %arg6[%c0_27, %c0_28, %c0_29] : memref<2x32x128xbf16, #tpu.memory_space<vmem>>, vector<1x32x128xbf16>
    %91 = vector.shape_cast %90 : vector<1x32x128xbf16> to vector<32x128xbf16>
    %cst_30 = arith.constant dense<0.000000e+00> : vector<8x128xf32>
    %92 = tpu.matmul %89, %91, %cst_30 {dimension_numbers = #tpu.dot_dimension_numbers<[1], [0], [0], [1], [0, 0, 1, 1], [], []>} : vector<8x32xbf16>, vector<32x128xbf16>, vector<8x128xf32> -> vector<8x128xf32>
    %93 = arith.addf %84, %92 : vector<8x128xf32>
    %c1 = arith.constant 1 : index
    %c0_31 = arith.constant 0 : index
    %c0_32 = arith.constant 0 : index
    %94 = vector.load %arg5[%c1, %c0_31, %c0_32] : memref<2x32x32xbf16, #tpu.memory_space<vmem>>, vector<1x32x32xbf16>
    %95 = vector.shape_cast %94 : vector<1x32x32xbf16> to vector<32x32xbf16>
    %cst_33 = arith.constant dense<0.000000e+00> : vector<8x32xf32>
    %96 = tpu.matmul %83, %95, %cst_33 {dimension_numbers = #tpu.dot_dimension_numbers<[1], [0], [0], [1], [0, 0, 1, 1], [], []>} : vector<8x32xbf16>, vector<32x32xbf16>, vector<8x32xf32> -> vector<8x32xf32>
    %97 = arith.mulf %96, %82 : vector<8x32xf32>
    %98 = arith.truncf %97 : vector<8x32xf32> to vector<8x32xbf16>
    %c1_34 = arith.constant 1 : index
    %c0_35 = arith.constant 0 : index
    %c0_36 = arith.constant 0 : index
    %99 = vector.load %arg6[%c1_34, %c0_35, %c0_36] : memref<2x32x128xbf16, #tpu.memory_space<vmem>>, vector<1x32x128xbf16>
    %100 = vector.shape_cast %99 : vector<1x32x128xbf16> to vector<32x128xbf16>
    %cst_37 = arith.constant dense<0.000000e+00> : vector<8x128xf32>
    %101 = tpu.matmul %98, %100, %cst_37 {dimension_numbers = #tpu.dot_dimension_numbers<[1], [0], [0], [1], [0, 0, 1, 1], [], []>} : vector<8x32xbf16>, vector<32x128xbf16>, vector<8x128xf32> -> vector<8x128xf32>
    %102 = arith.addf %93, %101 : vector<8x128xf32>
    %c0_38 = arith.constant 0 : index
    %c0_39 = arith.constant 0 : index
    %103 = vector.load %arg7[%c0_38, %c0_39] : memref<8x128xf32, #tpu.memory_space<vmem>>, vector<8x128xf32>
    tpu.vector_store %arg7[%c0_38, %c0_39], %102 {strides = array<i32>} : memref<8x128xf32, #tpu.memory_space<vmem>>, vector<8x128xf32>,
    return
  }
  func.func @transform_0(%arg0: i32, %arg1: memref<8xi32, #tpu.memory_space<smem>>, %arg2: memref<8xi32, #tpu.memory_space<smem>>) -> (i32, i32) {
    %c0_i32 = arith.constant 0 : i32
    %c0_i32_0 = arith.constant 0 : i32
    %c0_i32_1 = arith.constant 0 : i32
    return %c0_i32, %c0_i32_0 : i32, i32
  }
  func.func @transform_1(%arg0: i32, %arg1: memref<8xi32, #tpu.memory_space<smem>>, %arg2: memref<8xi32, #tpu.memory_space<smem>>) -> (i32, i32) {
    %c0_i32 = arith.constant 0 : i32
    %c0_i32_0 = arith.constant 0 : i32
    %c0_i32_1 = arith.constant 0 : i32
    return %c0_i32, %c0_i32_0 : i32, i32
  }
  func.func @transform_2(%arg0: i32, %arg1: memref<8xi32, #tpu.memory_space<smem>>, %arg2: memref<8xi32, #tpu.memory_space<smem>>) -> (i32, i32, i32) {
    %c0_i32 = arith.constant 0 : i32
    %c0_i32_0 = arith.constant 0 : i32
    %c0_i32_1 = arith.constant 0 : i32
    %c0_i32_2 = arith.constant 0 : i32
    return %c0_i32, %c0_i32_0, %c0_i32_1 : i32, i32, i32
  }
  func.func @transform_3(%arg0: i32, %arg1: memref<8xi32, #tpu.memory_space<smem>>, %arg2: memref<8xi32, #tpu.memory_space<smem>>) -> (i32, i32, i32) {
    %c0_i32 = arith.constant 0 : i32
    %c0_i32_0 = arith.constant 0 : i32
    %c0_i32_1 = arith.constant 0 : i32
    %c0_i32_2 = arith.constant 0 : i32
    return %c0_i32, %c0_i32_0, %c0_i32_1 : i32, i32, i32
  }
  func.func @transform_4(%arg0: i32, %arg1: memref<8xi32, #tpu.memory_space<smem>>, %arg2: memref<8xi32, #tpu.memory_space<smem>>) -> (i32, i32) {
    %c0_i32 = arith.constant 0 : i32
    %c0_i32_0 = arith.constant 0 : i32
    return %arg0, %c0_i32 : i32, i32
  }
}

</mosaic_0001>

<llo_original>
// kernel: graph_matrix_completion_forward.3
$region0: #{graph_matrix_completion_forward.3}
  #allocation0 [shape = 'u32[]', space=smem, size = 0x4, offset = 0x4, fixed_abs, tag = 'smem constant byte address 0x4 - core index']
  #allocation1 [shape = 'u32[144,128]{1,0:T(1,128)}', space=vmem, size = 0x12000, scoped, tag = 'internal scratch']
  #allocation2 [shape = 's32[1]{0}', space=sflag, size = 0x4, scoped, tag = 'scoped memory for graph_matrix_completion_forward.3']
  #allocation3 [shape = 'u8[512]{0}', space=smem, size = 0x200, scoped, tag = 'prefetched SMEM operand 0']
  #allocation4 [shape = 'u8[512]{0}', space=smem, size = 0x200, scoped, tag = 'prefetched SMEM operand 1']
  %s0 = inlined_call_operand.vmem [shape: s32[8], index: 0, kind: input, shape index: {}]
  %s1 = inlined_call_operand.vmem [shape: s32[8], index: 1, kind: input, shape index: {}]
  %s2 = inlined_call_operand.vmem [shape: f32[24,32], index: 2, kind: input, shape index: {}]
  %s3 = inlined_call_operand.vmem [shape: f32[16,32], index: 3, kind: input, shape index: {}]
  %s4 = inlined_call_operand.vmem [shape: bf16[2,32,32], index: 4, kind: input, shape index: {}]
  %s5 = inlined_call_operand.vmem [shape: bf16[2,32,128], index: 5, kind: input, shape index: {}]
  %s6 = inlined_call_operand.vmem [shape: f32[8,128], index: 6, kind: output, shape index: {}]
  %s7 = sld [smem:[#allocation0]]
  $region26: #{graph_matrix_completion_forward.3} parent=0
    _
  %s9 = ssub.s32 1, %s7
  %s10 = scalar_select 0, %s9, %s7
  %s11 = sshll.u32 %s0, 4
  %s12 = int_to_ptr.vmem [resolvable:$true] %s11
  %14 = dma.vmem_to_smem %s12, 16, [#allocation3], [#allocation2]
  %s15 = sshll.u32 %s1, 4
  %s16 = int_to_ptr.vmem [resolvable:$true] %s15
  %18 = dma.vmem_to_smem %s16, 16, [#allocation4], [#allocation2]
  %19 = dma.done [#allocation2], 32
  %20 = sfence
  // Predicated region
  $region2: #{graph_matrix_completion_forward.3} parent=0 // pred_check
    _
  $region3: #{graph_matrix_completion_forward.3} parent=0 // pred_check_branch
    %22 = sbr.rel (0) target = $region5
  $region4: #{graph_matrix_completion_forward.3} parent=0 // pred_region
    _
  $region5: #{graph_matrix_completion_forward.3} parent=0 // pred_fallthru
    _
  // Predicated region
  $region6: #{graph_matrix_completion_forward.3} parent=0 // pred_check
    _
  $region7: #{graph_matrix_completion_forward.3} parent=0 // pred_check_branch
    %24 = sbr.rel (0) target = $region9
  $region8: #{graph_matrix_completion_forward.3} parent=0 // pred_region
    _
  $region9: #{graph_matrix_completion_forward.3} parent=0 // pred_fallthru
    _
  // Predicated region
  $region10: #{graph_matrix_completion_forward.3} parent=0 // pred_check
    _
  $region11: #{graph_matrix_completion_forward.3} parent=0 // pred_check_branch
    %26 = sbr.rel (0) target = $region13
  $region12: #{graph_matrix_completion_forward.3} parent=0 // pred_region
    _
  $region13: #{graph_matrix_completion_forward.3} parent=0 // pred_fallthru
    _
  // Predicated region
  $region14: #{graph_matrix_completion_forward.3} parent=0 // pred_check
    _
  $region15: #{graph_matrix_completion_forward.3} parent=0 // pred_check_branch
    %28 = sbr.rel (0) target = $region17
  $region16: #{graph_matrix_completion_forward.3} parent=0 // pred_region
    _
  $region17: #{graph_matrix_completion_forward.3} parent=0 // pred_fallthru
    _
  %s30 = smul.u32 0, 8
  %s31 = sld [smem:[#allocation3 + %s30]]
  %s32 = sld [smem:[#allocation4 + %s30]]
  %s33 = scalar_lea.vmem %s2, %s31
  %v34 = vld [vmem:[%s33] sm:$0x1]
  %s35 = scalar_lea.vmem %s3, %s32
  %v36 = vld [vmem:[%s35] sm:$0x1]
  %s37 = sadd.s32 %s30, 1
  %s38 = sld [smem:[#allocation3 + %s37]]
  %s39 = sld [smem:[#allocation4 + %s37]]
  %s40 = scalar_lea.vmem %s2, %s38
  %v41 = vld [vmem:[%s40] sm:$0x1]
  %s42 = scalar_lea.vmem %s3, %s39
  %v43 = vld [vmem:[%s42] sm:$0x1]
  %s44 = sadd.s32 %s30, 2
  %s45 = sld [smem:[#allocation3 + %s44]]
  %s46 = sld [smem:[#allocation4 + %s44]]
  %s47 = scalar_lea.vmem %s2, %s45
  %v48 = vld [vmem:[%s47] sm:$0x1]
  %s49 = scalar_lea.vmem %s3, %s46
  %v50 = vld [vmem:[%s49] sm:$0x1]
  %s51 = sadd.s32 %s30, 3
  %s52 = sld [smem:[#allocation3 + %s51]]
  %s53 = sld [smem:[#allocation4 + %s51]]
  %s54 = scalar_lea.vmem %s2, %s52
  %v55 = vld [vmem:[%s54] sm:$0x1]
  %s56 = scalar_lea.vmem %s3, %s53
  %v57 = vld [vmem:[%s56] sm:$0x1]
  %s58 = sadd.s32 %s30, 4
  %s59 = sld [smem:[#allocation3 + %s58]]
  %s60 = sld [smem:[#allocation4 + %s58]]
  %s61 = scalar_lea.vmem %s2, %s59
  %v62 = vld [vmem:[%s61] sm:$0x1]
  %s63 = scalar_lea.vmem %s3, %s60
  %v64 = vld [vmem:[%s63] sm:$0x1]
  %s65 = sadd.s32 %s30, 5
  %s66 = sld [smem:[#allocation3 + %s65]]
  %s67 = sld [smem:[#allocation4 + %s65]]
  %s68 = scalar_lea.vmem %s2, %s66
  %v69 = vld [vmem:[%s68] sm:$0x1]
  %s70 = scalar_lea.vmem %s3, %s67
  %v71 = vld [vmem:[%s70] sm:$0x1]
  %s72 = sadd.s32 %s30, 6
  %s73 = sld [smem:[#allocation3 + %s72]]
  %s74 = sld [smem:[#allocation4 + %s72]]
  %s75 = scalar_lea.vmem %s2, %s73
  %v76 = vld [vmem:[%s75] sm:$0x1]
  %s77 = scalar_lea.vmem %s3, %s74
  %v78 = vld [vmem:[%s77] sm:$0x1]
  %s79 = sadd.s32 %s30, 7
  %s80 = sld [smem:[#allocation3 + %s79]]
  %s81 = sld [smem:[#allocation4 + %s79]]
  %s82 = scalar_lea.vmem %s2, %s80
  %v83 = vld [vmem:[%s82] sm:$0x1]
  %s84 = scalar_lea.vmem %s3, %s81
  %v85 = vld [vmem:[%s84] sm:$0x1]
  %v87 = vrot.slane %v41, 7
  %v90 = vrot.slane %v48, 6
  %v93 = vrot.slane %v55, 5
  %v96 = vrot.slane %v62, 4
  %v99 = vrot.slane %v69, 3
  %v102 = vrot.slane %v76, 2
  %v105 = vrot.slane %v83, 1
  %vm107 = vcmask 1040384
  %v108 = vsel %vm107, %v34, %v87
  %vm109 = vcmask 1041408
  %v110 = vsel %vm109, %v108, %v90
  %vm111 = vcmask 1042432
  %v112 = vsel %vm111, %v110, %v93
  %vm113 = vcmask 1043456
  %v114 = vsel %vm113, %v112, %v96
  %vm115 = vcmask 1044480
  %v116 = vsel %vm115, %v114, %v99
  %vm117 = vcmask 1045504
  %v118 = vsel %vm117, %v116, %v102
  %vm119 = vcmask 1046528
  %v120 = vsel %vm119, %v118, %v105
  %v122 = vrot.slane %v43, 7
  %v125 = vrot.slane %v50, 6
  %v128 = vrot.slane %v57, 5
  %v131 = vrot.slane %v64, 4
  %v134 = vrot.slane %v71, 3
  %v137 = vrot.slane %v78, 2
  %v140 = vrot.slane %v85, 1
  %v142 = vsel %vm107, %v36, %v122
  %v143 = vsel %vm109, %v142, %v125
  %v144 = vsel %vm111, %v143, %v128
  %v145 = vsel %vm113, %v144, %v131
  %v146 = vsel %vm115, %v145, %v134
  %v147 = vsel %vm117, %v146, %v137
  %v148 = vsel %vm119, %v147, %v140
  %v149 = vpack.c.bf16 %v120, %v120
  %v150 = vld [vmem:[%s4] sm:$0xf]
  %v151 = vld [vmem:[%s4 + $0x4] sm:$0xf]
  %v152 = vld [vmem:[%s4 + $0x8] sm:$0xf]
  %v153 = vld [vmem:[%s4 + $0xc] sm:$0xf]
  %v158 = vunpack.c.l.b16 %v150
  %v159 = vunpack.c.l.b16 %v151
  %v160 = vunpack.c.l.b16 %v152
  %v161 = vunpack.c.l.b16 %v153
  %v162 = vpack.c.b16 %v159, %v158
  %v163 = vpack.c.b16 %v161, %v160
  %vm166 = vcmask 261120
  %v168 = vsel %vm166, %v149, 0
  %170 = vmatprep.subr.bf16.mxu0 0
  %171 = vmatpush1.bf16.msra.mxu0 %v162
  %172 = vmatprep.subr.bf16.mxu0 0
  %173 = vmatpush1.bf16.msra.mxu0 %v163
  %174 = vmatprep.subr.bf16.mxu0 0
  %175 = vmatpush1.bf16.msra.mxu0 0
  %176 = vmatprep.subr.bf16.mxu0 0
  %177 = vmatpush1.bf16.msra.mxu0 0
  %178 = vmatprep.subr.bf16.mxu0 0
  %179 = vmatpush1.bf16.msra.mxu0 0
  %180 = vmatprep.subr.bf16.mxu0 0
  %181 = vmatpush1.bf16.msra.mxu0 0
  %182 = vmatprep.subr.bf16.mxu0 0
  %183 = vmatpush1.bf16.msra.mxu0 0
  %184 = vmatprep.subr.bf16.mxu0 0
  %185 = vmatpush1.bf16.msra.mxu0 0
  %186 = vmatprep.subr.bf16.mxu0 0
  %187 = vmatpush1.bf16.msra.mxu0 0
  %188 = vmatprep.subr.bf16.mxu0 0
  %189 = vmatpush1.bf16.msra.mxu0 0
  %190 = vmatprep.subr.bf16.mxu0 0
  %191 = vmatpush1.bf16.msra.mxu0 0
  %192 = vmatprep.subr.bf16.mxu0 0
  %193 = vmatpush1.bf16.msra.mxu0 0
  %194 = vmatprep.subr.bf16.mxu0 0
  %195 = vmatpush1.bf16.msra.mxu0 0
  %196 = vmatprep.subr.bf16.mxu0 0
  %197 = vmatpush1.bf16.msra.mxu0 0
  %198 = vmatprep.subr.bf16.mxu0 0
  %199 = vmatpush1.bf16.msra.mxu0 0
  %200 = vmatprep.subr.bf16.mxu0 0
  %201 = vmatpush1.bf16.msra.mxu0 0
  %202 = vmatprep.mubr.bf16.mxu0 0
  %203 = vmatmul.mubr.bf16.gmra.mrb[0].mxu0 %v168
  %v204 = vpop.f32.mrb[0].mxu0
  %v205 = vadd.f32 0.0, %v204
  %v206 = vpop.f32.mrb[0].mxu0
  %v207 = vpop.f32.mrb[0].mxu0
  %v208 = vpop.f32.mrb[0].mxu0
  %209 = vdwg.mxu0
  %v210 = vmul.f32 %v205, %v148
  %v211 = vpack.c.bf16 %v210, %v210
  %v212 = vld [vmem:[%s5] sm:$0xf]
  %v213 = vld [vmem:[%s5 + $0x4] sm:$0xf]
  %v214 = vld [vmem:[%s5 + $0x8] sm:$0xf]
  %v215 = vld [vmem:[%s5 + $0xc] sm:$0xf]
  %s216 = scalar_lea.vmem %s4, 16
  %v217 = vld [vmem:[%s216] sm:$0xf]
  %v218 = vld [vmem:[%s216 + $0x4] sm:$0xf]
  %v219 = vld [vmem:[%s216 + $0x8] sm:$0xf]
  %v220 = vld [vmem:[%s216 + $0xc] sm:$0xf]
  %v225 = vunpack.c.l.b16 %v217
  %v226 = vunpack.c.l.b16 %v218
  %v227 = vunpack.c.l.b16 %v219
  %v228 = vunpack.c.l.b16 %v220
  %v229 = vpack.c.b16 %v226, %v225
  %v230 = vpack.c.b16 %v228, %v227
  %233 = vmatprep.subr.bf16.mxu0 0
  %234 = vmatpush1.bf16.msra.mxu0 %v229
  %235 = vmatprep.subr.bf16.mxu0 0
  %236 = vmatpush1.bf16.msra.mxu0 %v230
  %237 = vmatprep.subr.bf16.mxu0 0
  %238 = vmatpush1.bf16.msra.mxu0 0
  %239 = vmatprep.subr.bf16.mxu0 0
  %240 = vmatpush1.bf16.msra.mxu0 0
  %241 = vmatprep.subr.bf16.mxu0 0
  %242 = vmatpush1.bf16.msra.mxu0 0
  %243 = vmatprep.subr.bf16.mxu0 0
  %244 = vmatpush1.bf16.msra.mxu0 0
  %245 = vmatprep.subr.bf16.mxu0 0
  %246 = vmatpush1.bf16.msra.mxu0 0
  %247 = vmatprep.subr.bf16.mxu0 0
  %248 = vmatpush1.bf16.msra.mxu0 0
  %249 = vmatprep.subr.bf16.mxu0 0
  %250 = vmatpush1.bf16.msra.mxu0 0
  %251 = vmatprep.subr.bf16.mxu0 0
  %252 = vmatpush1.bf16.msra.mxu0 0
  %253 = vmatprep.subr.bf16.mxu0 0
  %254 = vmatpush1.bf16.msra.mxu0 0
  %255 = vmatprep.subr.bf16.mxu0 0
  %256 = vmatpush1.bf16.msra.mxu0 0
  %257 = vmatprep.subr.bf16.mxu0 0
  %258 = vmatpush1.bf16.msra.mxu0 0
  %259 = vmatprep.subr.bf16.mxu0 0
  %260 = vmatpush1.bf16.msra.mxu0 0
  %261 = vmatprep.subr.bf16.mxu0 0
  %262 = vmatpush1.bf16.msra.mxu0 0
  %263 = vmatprep.subr.bf16.mxu0 0
  %264 = vmatpush1.bf16.msra.mxu0 0
  %265 = vmatprep.mubr.bf16.mxu0 0
  %266 = vmatmul.mubr.bf16.gmra.mrb[0].mxu0 %v168
  %v267 = vpop.f32.mrb[0].mxu0
  %v268 = vadd.f32 0.0, %v267
  %v269 = vpop.f32.mrb[0].mxu0
  %v270 = vpop.f32.mrb[0].mxu0
  %v271 = vpop.f32.mrb[0].mxu0
  %272 = vdwg.mxu0
  %v273 = vmul.f32 %v268, %v148
  %v274 = vpack.c.bf16 %v273, %v273
  %s275 = scalar_lea.vmem %s5, 16
  %v276 = vld [vmem:[%s275] sm:$0xf]
  %v277 = vld [vmem:[%s275 + $0x4] sm:$0xf]
  %v278 = vld [vmem:[%s275 + $0x8] sm:$0xf]
  %v279 = vld [vmem:[%s275 + $0xc] sm:$0xf]
  %v284 = vunpack.c.l.b16 %v276
  %v285 = vunpack.c.l.b16 %v277
  %v286 = vunpack.c.l.b16 %v278
  %v287 = vunpack.c.l.b16 %v279
  %v288 = vpack.c.b16 %v285, %v284
  %v289 = vpack.c.b16 %v287, %v286
  %v293 = vsel %vm166, %v274, 0
  %295 = vmatprep.subr.bf16.mxu0 0
  %296 = vmatpush1.bf16.msra.mxu0 %v288
  %297 = vmatprep.subr.bf16.mxu0 0
  %298 = vmatpush1.bf16.msra.mxu0 %v289
  %299 = vmatprep.subr.bf16.mxu0 0
  %300 = vmatpush1.bf16.msra.mxu0 0
  %301 = vmatprep.subr.bf16.mxu0 0
  %302 = vmatpush1.bf16.msra.mxu0 0
  %303 = vmatprep.subr.bf16.mxu0 0
  %304 = vmatpush1.bf16.msra.mxu0 0
  %305 = vmatprep.subr.bf16.mxu0 0
  %306 = vmatpush1.bf16.msra.mxu0 0
  %307 = vmatprep.subr.bf16.mxu0 0
  %308 = vmatpush1.bf16.msra.mxu0 0
  %309 = vmatprep.subr.bf16.mxu0 0
  %310 = vmatpush1.bf16.msra.mxu0 0
  %311 = vmatprep.subr.bf16.mxu0 0
  %312 = vmatpush1.bf16.msra.mxu0 0
  %313 = vmatprep.subr.bf16.mxu0 0
  %314 = vmatpush1.bf16.msra.mxu0 0
  %315 = vmatprep.subr.bf16.mxu0 0
  %316 = vmatpush1.bf16.msra.mxu0 0
  %317 = vmatprep.subr.bf16.mxu0 0
  %318 = vmatpush1.bf16.msra.mxu0 0
  %319 = vmatprep.subr.bf16.mxu0 0
  %320 = vmatpush1.bf16.msra.mxu0 0
  %321 = vmatprep.subr.bf16.mxu0 0
  %322 = vmatpush1.bf16.msra.mxu0 0
  %323 = vmatprep.subr.bf16.mxu0 0
  %324 = vmatpush1.bf16.msra.mxu0 0
  %325 = vmatprep.subr.bf16.mxu0 0
  %326 = vmatpush1.bf16.msra.mxu0 0
  %327 = vmatprep.mubr.bf16.mxu0 0
  %328 = vmatmul.mubr.bf16.gmra.mrb[0].mxu0 %v293
  %v329 = vpop.f32.mrb[0].mxu0
  %v330 = vadd.f32 0.0, %v329
  %v331 = vpop.f32.mrb[0].mxu0
  %v332 = vpop.f32.mrb[0].mxu0
  %v333 = vpop.f32.mrb[0].mxu0
  %334 = vdwg.mxu0
  %v339 = vunpack.c.l.b16 %v212
  %v340 = vunpack.c.l.b16 %v213
  %v341 = vunpack.c.l.b16 %v214
  %v342 = vunpack.c.l.b16 %v215
  %v343 = vpack.c.b16 %v340, %v339
  %v344 = vpack.c.b16 %v342, %v341
  %v348 = vsel %vm166, %v211, 0
  %350 = vmatprep.subr.bf16.mxu0 0
  %351 = vmatpush1.bf16.msra.mxu0 %v343
  %352 = vmatprep.subr.bf16.mxu0 0
  %353 = vmatpush1.bf16.msra.mxu0 %v344
  %354 = vmatprep.subr.bf16.mxu0 0
  %355 = vmatpush1.bf16.msra.mxu0 0
  %356 = vmatprep.subr.bf16.mxu0 0
  %357 = vmatpush1.bf16.msra.mxu0 0
  %358 = vmatprep.subr.bf16.mxu0 0
  %359 = vmatpush1.bf16.msra.mxu0 0
  %360 = vmatprep.subr.bf16.mxu0 0
  %361 = vmatpush1.bf16.msra.mxu0 0
  %362 = vmatprep.subr.bf16.mxu0 0
  %363 = vmatpush1.bf16.msra.mxu0 0
  %364 = vmatprep.subr.bf16.mxu0 0
  %365 = vmatpush1.bf16.msra.mxu0 0
  %366 = vmatprep.subr.bf16.mxu0 0
  %367 = vmatpush1.bf16.msra.mxu0 0
  %368 = vmatprep.subr.bf16.mxu0 0
  %369 = vmatpush1.bf16.msra.mxu0 0
  %370 = vmatprep.subr.bf16.mxu0 0
  %371 = vmatpush1.bf16.msra.mxu0 0
  %372 = vmatprep.subr.bf16.mxu0 0
  %373 = vmatpush1.bf16.msra.mxu0 0
  %374 = vmatprep.subr.bf16.mxu0 0
  %375 = vmatpush1.bf16.msra.mxu0 0
  %376 = vmatprep.subr.bf16.mxu0 0
  %377 = vmatpush1.bf16.msra.mxu0 0
  %378 = vmatprep.subr.bf16.mxu0 0
  %379 = vmatpush1.bf16.msra.mxu0 0
  %380 = vmatprep.subr.bf16.mxu0 0
  %381 = vmatpush1.bf16.msra.mxu0 0
  %382 = vmatprep.mubr.bf16.mxu0 0
  %383 = vmatmul.mubr.bf16.gmra.mrb[0].mxu0 %v348
  %v384 = vpop.f32.mrb[0].mxu0
  %v385 = vadd.f32 %v330, %v384
  %v386 = vpop.f32.mrb[0].mxu0
  %v387 = vpop.f32.mrb[0].mxu0
  %v388 = vpop.f32.mrb[0].mxu0
  %389 = vdwg.mxu0
  %390 = vst [vmem:[%s6] sm:$0xff] %v385
  // Predicated region
  $region18: #{graph_matrix_completion_forward.3} parent=0 // pred_check
    _
  $region19: #{graph_matrix_completion_forward.3} parent=0 // pred_check_branch
    %392 = sbr.rel (0) target = $region21
  $region20: #{graph_matrix_completion_forward.3} parent=0 // pred_region
    _
  $region21: #{graph_matrix_completion_forward.3} parent=0 // pred_fallthru
    _
  // Predicated region
  $region22: #{graph_matrix_completion_forward.3} parent=0 // pred_check
    _
  $region23: #{graph_matrix_completion_forward.3} parent=0 // pred_check_branch
    %394 = sbr.rel (0) target = $region25
  $region24: #{graph_matrix_completion_forward.3} parent=0 // pred_region
    _
  $region25: #{graph_matrix_completion_forward.3} parent=0 // pred_fallthru
    _

// kernel: graph_matrix_completion_forward.2
$region0: #{graph_matrix_completion_forward.2}
  #allocation0 [shape = 'u32[]', space=smem, size = 0x4, offset = 0x4, fixed_abs, tag = 'smem constant byte address 0x4 - core index']
  #allocation1 [shape = 'u32[144,128]{1,0:T(1,128)}', space=vmem, size = 0x12000, scoped, tag = 'internal scratch']
  %s0 = inlined_call_operand.vmem [shape: bf16[2,24,16], index: 0, kind: input, shape index: {}]
  %s1 = inlined_call_operand.vmem [shape: bf16[2,16,24], index: 1, kind: input, shape index: {}]
  %s2 = inlined_call_operand.vmem [shape: bf16[40,40], index: 2, kind: input, shape index: {}]
  %s3 = inlined_call_operand.vmem [shape: bf16[24,24], index: 3, kind: input, shape index: {}]
  %s4 = inlined_call_operand.vmem [shape: bf16[16,24], index: 4, kind: input, shape index: {}]
  %s5 = inlined_call_operand.vmem [shape: bf16[40,32], index: 5, kind: input, shape index: {}]
  %s6 = inlined_call_operand.vmem [shape: bf16[24,16], index: 6, kind: input, shape index: {}]
  %s7 = inlined_call_operand.vmem [shape: f32[1,16], index: 7, kind: input, shape index: {}]
  %s8 = inlined_call_operand.vmem [shape: bf16[24,16], index: 8, kind: input, shape index: {}]
  %s9 = inlined_call_operand.vmem [shape: f32[1,16], index: 9, kind: input, shape index: {}]
  %s10 = inlined_call_operand.vmem [shape: bf16[2,16,32], index: 10, kind: input, shape index: {}]
  %s11 = inlined_call_operand.vmem [shape: bf16[16,32], index: 11, kind: input, shape index: {}]
  %s12 = inlined_call_operand.vmem [shape: bf16[2,16,32], index: 12, kind: input, shape index: {}]
  %s13 = inlined_call_operand.vmem [shape: bf16[16,32], index: 13, kind: input, shape index: {}]
  %s14 = inlined_call_operand.vmem [shape: f32[24,32], index: 14, kind: output, shape index: {0}]
  %s15 = inlined_call_operand.vmem [shape: f32[16,32], index: 15, kind: output, shape index: {1}]
  %16 = xla_tuple %s14, %s15
  %s17 = sld [smem:[#allocation0]]
  $region74: #{graph_matrix_completion_forward.2} parent=0
    _
  %s19 = ssub.s32 1, %s17
  %s20 = scalar_select 0, %s19, %s17
  // Predicated region
  $region2: #{graph_matrix_completion_forward.2} parent=0 // pred_check
    _
  $region3: #{graph_matrix_completion_forward.2} parent=0 // pred_check_branch
    %22 = sbr.rel (0) target = $region5
  $region4: #{graph_matrix_completion_forward.2} parent=0 // pred_region
    _
  $region5: #{graph_matrix_completion_forward.2} parent=0 // pred_fallthru
    _
  // Predicated region
  $region6: #{graph_matrix_completion_forward.2} parent=0 // pred_check
    _
  $region7: #{graph_matrix_completion_forward.2} parent=0 // pred_check_branch
    %24 = sbr.rel (0) target = $region9
  $region8: #{graph_matrix_completion_forward.2} parent=0 // pred_region
    _
  $region9: #{graph_matrix_completion_forward.2} parent=0 // pred_fallthru
    _
  // Predicated region
  $region10: #{graph_matrix_completion_forward.2} parent=0 // pred_check
    _
  $region11: #{graph_matrix_completion_forward.2} parent=0 // pred_check_branch
    %26 = sbr.rel (0) target = $region13
  $region12: #{graph_matrix_completion_forward.2} parent=0 // pred_region
    _
  $region13: #{graph_matrix_completion_forward.2} parent=0 // pred_fallthru
    _
  // Predicated region
  $region14: #{graph_matrix_completion_forward.2} parent=0 // pred_check
    _
  $region15: #{graph_matrix_completion_forward.2} parent=0 // pred_check_branch
    %28 = sbr.rel (0) target = $region17
  $region16: #{graph_matrix_completion_forward.2} parent=0 // pred_region
    _
  $region17: #{graph_matrix_completion_forward.2} parent=0 // pred_fallthru
    _
  // Predicated region
  $region18: #{graph_matrix_completion_forward.2} parent=0 // pred_check
    _
  $region19: #{graph_matrix_completion_forward.2} parent=0 // pred_check_branch
    %30 = sbr.rel (0) target = $region21
  $region20: #{graph_matrix_completion_forward.2} parent=0 // pred_region
    _
  $region21: #{graph_matrix_completion_forward.2} parent=0 // pred_fallthru
    _
  // Predicated region
  $region22: #{graph_matrix_completion_forward.2} parent=0 // pred_check
    _
  $region23: #{graph_matrix_completion_forward.2} parent=0 // pred_check_branch
    %32 = sbr.rel (0) target = $region25
  $region24: #{graph_matrix_completion_forward.2} parent=0 // pred_region
    _
  $region25: #{graph_matrix_completion_forward.2} parent=0 // pred_fallthru
    _
  // Predicated region
  $region26: #{graph_matrix_completion_forward.2} parent=0 // pred_check
    _
  $region27: #{graph_matrix_completion_forward.2} parent=0 // pred_check_branch
    %34 = sbr.rel (0) target = $region29
  $region28: #{graph_matrix_completion_forward.2} parent=0 // pred_region
    _
  $region29: #{graph_matrix_completion_forward.2} parent=0 // pred_fallthru
    _
  // Predicated region
  $region30: #{graph_matrix_completion_forward.2} parent=0 // pred_check
    _
  $region31: #{graph_matrix_completion_forward.2} parent=0 // pred_check_branch
    %36 = sbr.rel (0) target = $region33
  $region32: #{graph_matrix_completion_forward.2} parent=0 // pred_region
    _
  $region33: #{graph_matrix_completion_forward.2} parent=0 // pred_fallthru
    _
  // Predicated region
  $region34: #{graph_matrix_completion_forward.2} parent=0 // pred_check
    _
  $region35: #{graph_matrix_completion_forward.2} parent=0 // pred_check_branch
    %38 = sbr.rel (0) target = $region37
  $region36: #{graph_matrix_completion_forward.2} parent=0 // pred_region
    _
  $region37: #{graph_matrix_completion_forward.2} parent=0 // pred_fallthru
    _
  // Predicated region
  $region38: #{graph_matrix_completion_forward.2} parent=0 // pred_check
    _
  $region39: #{graph_matrix_completion_forward.2} parent=0 // pred_check_branch
    %40 = sbr.rel (0) target = $region41
  $region40: #{graph_matrix_completion_forward.2} parent=0 // pred_region
    _
  $region41: #{graph_matrix_completion_forward.2} parent=0 // pred_fallthru
    _
  // Predicated region
  $region42: #{graph_matrix_completion_forward.2} parent=0 // pred_check
    _
  $region43: #{graph_matrix_completion_forward.2} parent=0 // pred_check_branch
    %42 = sbr.rel (0) target = $region45
  $region44: #{graph_matrix_completion_forward.2} parent=0 // pred_region
    _
  $region45: #{graph_matrix_completion_forward.2} parent=0 // pred_fallthru
    _
  // Predicated region
  $region46: #{graph_matrix_completion_forward.2} parent=0 // pred_check
    _
  $region47: #{graph_matrix_completion_forward.2} parent=0 // pred_check_branch
    %44 = sbr.rel (0) target = $region49
  $region48: #{graph_matrix_completion_forward.2} parent=0 // pred_region
    _
  $region49: #{graph_matrix_completion_forward.2} parent=0 // pred_fallthru
    _
  // Predicated region
  $region50: #{graph_matrix_completion_forward.2} parent=0 // pred_check
    _
  $region51: #{graph_matrix_completion_forward.2} parent=0 // pred_check_branch
    %46 = sbr.rel (0) target = $region53
  $region52: #{graph_matrix_completion_forward.2} parent=0 // pred_region
    _
  $region53: #{graph_matrix_completion_forward.2} parent=0 // pred_fallthru
    _
  // Predicated region
  $region54: #{graph_matrix_completion_forward.2} parent=0 // pred_check
    _
  $region55: #{graph_matrix_completion_forward.2} parent=0 // pred_check_branch
    %48 = sbr.rel (0) target = $region57
  $region56: #{graph_matrix_completion_forward.2} parent=0 // pred_region
    _
  $region57: #{graph_matrix_completion_forward.2} parent=0 // pred_fallthru
    _
  %v50 = vld [vmem:[%s2] sm:$0xf]
  %v51 = vld [vmem:[%s2 + $0x4] sm:$0xf]
  %v52 = vld [vmem:[%s2 + $0x8] sm:$0xf]
  %v53 = vld [vmem:[%s2 + $0xc] sm:$0xf]
  %v54 = vld [vmem:[%s2 + $0x10] sm:$0xf]
  %v55 = vld [vmem:[%s5] sm:$0xf]
  %v56 = vld [vmem:[%s5 + $0x4] sm:$0xf]
  %v57 = vld [vmem:[%s5 + $0x8] sm:$0xf]
  %v58 = vld [vmem:[%s5 + $0xc] sm:$0xf]
  %v59 = vld [vmem:[%s5 + $0x10] sm:$0xf]
  %v65 = vunpack.c.l.b16 %v50
  %v66 = vunpack.c.l.b16 %v51
  %v67 = vunpack.c.l.b16 %v52
  %v68 = vunpack.c.l.b16 %v53
  %v69 = vunpack.c.l.b16 %v54
  %v70 = vpack.c.b16 %v66, %v65
  %v71 = vpack.c.b16 %v68, %v67
  %v72 = vpack.c.b16 %v69, %v69
  %v78 = vunpack.c.l.b16 %v55
  %v79 = vunpack.c.l.b16 %v56
  %v80 = vunpack.c.l.b16 %v57
  %v81 = vunpack.c.l.b16 %v58
  %v82 = vunpack.c.l.b16 %v59
  %v83 = vpack.c.b16 %v79, %v78
  %v84 = vpack.c.b16 %v81, %v80
  %v85 = vpack.c.b16 %v82, %v82
  %vm88 = vcmask 326656
  %v90 = vsel %vm88, %v70, 0
  %v93 = vsel %vm88, %v71, 0
  %v96 = vsel %vm88, %v72, 0
  %vm98 = vcmask 1043456
  %v100 = vsel %vm98, %v85, 0
  %102 = vmatprep.subr.bf16.mxu0 0
  %103 = vmatpush1.bf16.msra.mxu0 %v83
  %104 = vmatprep.subr.bf16.mxu0 0
  %105 = vmatpush1.bf16.msra.mxu0 %v84
  %106 = vmatprep.subr.bf16.mxu0 0
  %107 = vmatpush1.bf16.msra.mxu0 %v100
  %108 = vmatprep.subr.bf16.mxu0 0
  %109 = vmatpush1.bf16.msra.mxu0 0
  %110 = vmatprep.subr.bf16.mxu0 0
  %111 = vmatpush1.bf16.msra.mxu0 0
  %112 = vmatprep.subr.bf16.mxu0 0
  %113 = vmatpush1.bf16.msra.mxu0 0
  %114 = vmatprep.subr.bf16.mxu0 0
  %115 = vmatpush1.bf16.msra.mxu0 0
  %116 = vmatprep.subr.bf16.mxu0 0
  %117 = vmatpush1.bf16.msra.mxu0 0
  %118 = vmatprep.subr.bf16.mxu0 0
  %119 = vmatpush1.bf16.msra.mxu0 0
  %120 = vmatprep.subr.bf16.mxu0 0
  %121 = vmatpush1.bf16.msra.mxu0 0
  %122 = vmatprep.subr.bf16.mxu0 0
  %123 = vmatpush1.bf16.msra.mxu0 0
  %124 = vmatprep.subr.bf16.mxu0 0
  %125 = vmatpush1.bf16.msra.mxu0 0
  %126 = vmatprep.subr.bf16.mxu0 0
  %127 = vmatpush1.bf16.msra.mxu0 0
  %128 = vmatprep.subr.bf16.mxu0 0
  %129 = vmatpush1.bf16.msra.mxu0 0
  %130 = vmatprep.subr.bf16.mxu0 0
  %131 = vmatpush1.bf16.msra.mxu0 0
  %132 = vmatprep.subr.bf16.mxu0 0
  %133 = vmatpush1.bf16.msra.mxu0 0
  %134 = vmatprep.mubr.bf16.mxu0 0
  %135 = vmatmul.mubr.bf16.gmra.mrb[0].mxu0 %v90
  %v136 = vpop.f32.mrb[0].mxu0
  %v137 = vadd.f32 0.0, %v136
  %v138 = vpop.f32.mrb[0].mxu0
  %v139 = vpop.f32.mrb[0].mxu0
  %v140 = vadd.f32 0.0, %v139
  %v141 = vpop.f32.mrb[0].mxu0
  %142 = vmatprep.mubr.bf16.mxu0 0
  %143 = vmatmul.mubr.bf16.gmra.mrb[0].mxu0 %v93
  %v144 = vpop.f32.mrb[0].mxu0
  %v145 = vadd.f32 0.0, %v144
  %v146 = vpop.f32.mrb[0].mxu0
  %v147 = vpop.f32.mrb[0].mxu0
  %v148 = vadd.f32 0.0, %v147
  %v149 = vpop.f32.mrb[0].mxu0
  %150 = vmatprep.mubr.bf16.mxu0 0
  %151 = vmatmul.mubr.bf16.gmra.mrb[0].mxu0 %v96
  %v152 = vpop.f32.mrb[0].mxu0
  %v153 = vadd.f32 0.0, %v152
  %v154 = vpop.f32.mrb[0].mxu0
  %v155 = vpop.f32.mrb[0].mxu0
  %v156 = vpop.f32.mrb[0].mxu0
  %157 = vdwg.mxu0
  %v158 = vpack.c.bf16 %v140, %v137
  %v159 = vpack.c.bf16 %v145, %v145
  %v160 = vpack.c.bf16 %v153, %v148
  %v161 = vld [vmem:[%s0] sm:$0xf]
  %v162 = vld [vmem:[%s0 + $0x4] sm:$0xf]
  %v163 = vld [vmem:[%s0 + $0x8] sm:$0xf]
  %v167 = vunpack.c.l.b16 %v161
  %v168 = vunpack.c.l.b16 %v162
  %v169 = vunpack.c.l.b16 %v163
  %v170 = vpack.c.b16 %v168, %v167
  %v171 = vpack.c.b16 %v169, %v169
  %vm172 = vcmask 130048
  %v174 = vsel %vm172, %v170, 0
  %v177 = vsel %vm172, %v171, 0
  %179 = vmatprep.subr.bf16.mxu0 0
  %180 = vmatpush1.bf16.msra.mxu0 %v160
  %181 = vmatprep.subr.bf16.mxu0 0
  %182 = vmatpush1.bf16.msra.mxu0 0
  %183 = vmatprep.subr.bf16.mxu0 0
  %184 = vmatpush1.bf16.msra.mxu0 0
  %185 = vmatprep.subr.bf16.mxu0 0
  %186 = vmatpush1.bf16.msra.mxu0 0
  %187 = vmatprep.subr.bf16.mxu0 0
  %188 = vmatpush1.bf16.msra.mxu0 0
  %189 = vmatprep.subr.bf16.mxu0 0
  %190 = vmatpush1.bf16.msra.mxu0 0
  %191 = vmatprep.subr.bf16.mxu0 0
  %192 = vmatpush1.bf16.msra.mxu0 0
  %193 = vmatprep.subr.bf16.mxu0 0
  %194 = vmatpush1.bf16.msra.mxu0 0
  %195 = vmatprep.subr.bf16.mxu0 0
  %196 = vmatpush1.bf16.msra.mxu0 0
  %197 = vmatprep.subr.bf16.mxu0 0
  %198 = vmatpush1.bf16.msra.mxu0 0
  %199 = vmatprep.subr.bf16.mxu0 0
  %200 = vmatpush1.bf16.msra.mxu0 0
  %201 = vmatprep.subr.bf16.mxu0 0
  %202 = vmatpush1.bf16.msra.mxu0 0
  %203 = vmatprep.subr.bf16.mxu0 0
  %204 = vmatpush1.bf16.msra.mxu0 0
  %205 = vmatprep.subr.bf16.mxu0 0
  %206 = vmatpush1.bf16.msra.mxu0 0
  %207 = vmatprep.subr.bf16.mxu0 0
  %208 = vmatpush1.bf16.msra.mxu0 0
  %209 = vmatprep.subr.bf16.mxu0 0
  %210 = vmatpush1.bf16.msra.mxu0 0
  %211 = vmatprep.mubr.bf16.mxu0 0
  %212 = vmatmul.mubr.bf16.gmra.mrb[0].mxu0 %v174
  %v213 = vpop.f32.mrb[0].mxu0
  %v214 = vadd.f32 0.0, %v213
  %v215 = vpop.f32.mrb[0].mxu0
  %v216 = vpop.f32.mrb[0].mxu0
  %v217 = vadd.f32 0.0, %v216
  %v218 = vpop.f32.mrb[0].mxu0
  %219 = vmatprep.mubr.bf16.mxu0 0
  %220 = vmatmul.mubr.bf16.gmra.mrb[0].mxu0 %v177
  %v221 = vpop.f32.mrb[0].mxu0
  %v222 = vadd.f32 0.0, %v221
  %v223 = vpop.f32.mrb[0].mxu0
  %v224 = vpop.f32.mrb[0].mxu0
  %v225 = vpop.f32.mrb[0].mxu0
  %226 = vdwg.mxu0
  %v227 = vmax.f32 %v214, 0.0
  %v228 = vmax.f32 %v217, 0.0
  %v229 = vmax.f32 %v222, 0.0
  %v230 = vld [vmem:[%s1] sm:$0xf]
  %v231 = vld [vmem:[%s1 + $0x4] sm:$0xf]
  %v234 = vunpack.c.l.b16 %v230
  %v235 = vunpack.c.l.b16 %v231
  %v236 = vpack.c.b16 %v235, %v234
  %vm237 = vcmask 195584
  %v239 = vsel %vm237, %v236, 0
  %v242 = vsel %vm98, %v159, 0
  %244 = vmatprep.subr.bf16.mxu0 0
  %245 = vmatpush1.bf16.msra.mxu0 %v158
  %246 = vmatprep.subr.bf16.mxu0 0
  %247 = vmatpush1.bf16.msra.mxu0 %v242
  %248 = vmatprep.subr.bf16.mxu0 0
  %249 = vmatpush1.bf16.msra.mxu0 0
  %250 = vmatprep.subr.bf16.mxu0 0
  %251 = vmatpush1.bf16.msra.mxu0 0
  %252 = vmatprep.subr.bf16.mxu0 0
  %253 = vmatpush1.bf16.msra.mxu0 0
  %254 = vmatprep.subr.bf16.mxu0 0
  %255 = vmatpush1.bf16.msra.mxu0 0
  %256 = vmatprep.subr.bf16.mxu0 0
  %257 = vmatpush1.bf16.msra.mxu0 0
  %258 = vmatprep.subr.bf16.mxu0 0
  %259 = vmatpush1.bf16.msra.mxu0 0
  %260 = vmatprep.subr.bf16.mxu0 0
  %261 = vmatpush1.bf16.msra.mxu0 0
  %262 = vmatprep.subr.bf16.mxu0 0
  %263 = vmatpush1.bf16.msra.mxu0 0
  %264 = vmatprep.subr.bf16.mxu0 0
  %265 = vmatpush1.bf16.msra.mxu0 0
  %266 = vmatprep.subr.bf16.mxu0 0
  %267 = vmatpush1.bf16.msra.mxu0 0
  %268 = vmatprep.subr.bf16.mxu0 0
  %269 = vmatpush1.bf16.msra.mxu0 0
  %270 = vmatprep.subr.bf16.mxu0 0
  %271 = vmatpush1.bf16.msra.mxu0 0
  %272 = vmatprep.subr.bf16.mxu0 0
  %273 = vmatpush1.bf16.msra.mxu0 0
  %274 = vmatprep.subr.bf16.mxu0 0
  %275 = vmatpush1.bf16.msra.mxu0 0
  %276 = vmatprep.mubr.bf16.mxu0 0
  %277 = vmatmul.mubr.bf16.gmra.mrb[0].mxu0 %v239
  %v278 = vpop.f32.mrb[0].mxu0
  %v279 = vadd.f32 0.0, %v278
  %v280 = vpop.f32.mrb[0].mxu0
  %v281 = vpop.f32.mrb[0].mxu0
  %v282 = vadd.f32 0.0, %v281
  %v283 = vpop.f32.mrb[0].mxu0
  %284 = vdwg.mxu0
  %v285 = vmax.f32 %v279, 0.0
  %v286 = vmax.f32 %v282, 0.0
  %v287 = vpack.c.bf16 %v228, %v227
  %v288 = vpack.c.bf16 %v229, %v229
  %v289 = vld [vmem:[%s10] sm:$0xf]
  %v290 = vld [vmem:[%s10 + $0x4] sm:$0xf]
  %v291 = vpack.c.bf16 %v286, %v285
  %v292 = vld [vmem:[%s12] sm:$0xf]
  %v293 = vld [vmem:[%s12 + $0x4] sm:$0xf]
  %s294 = scalar_lea.vmem %s0, 12
  %v295 = vld [vmem:[%s294] sm:$0xf]
  %v296 = vld [vmem:[%s294 + $0x4] sm:$0xf]
  %v297 = vld [vmem:[%s294 + $0x8] sm:$0xf]
  %v301 = vunpack.c.l.b16 %v295
  %v302 = vunpack.c.l.b16 %v296
  %v303 = vunpack.c.l.b16 %v297
  %v304 = vpack.c.b16 %v302, %v301
  %v305 = vpack.c.b16 %v303, %v303
  %307 = vrot.lane.b32.xlu0 %v160, 112
  %v308 = vpop.permute.xlu0 %307
  %v311 = vsel %vm172, %v304, 0
  %v314 = vsel %vm172, %v305, 0
  %316 = vmatprep.subr.bf16.mxu0 0
  %317 = vmatpush1.bf16.msra.mxu0 %v308
  %318 = vmatprep.subr.bf16.mxu0 0
  %319 = vmatpush1.bf16.msra.mxu0 0
  %320 = vmatprep.subr.bf16.mxu0 0
  %321 = vmatpush1.bf16.msra.mxu0 0
  %322 = vmatprep.subr.bf16.mxu0 0
  %323 = vmatpush1.bf16.msra.mxu0 0
  %324 = vmatprep.subr.bf16.mxu0 0
  %325 = vmatpush1.bf16.msra.mxu0 0
  %326 = vmatprep.subr.bf16.mxu0 0
  %327 = vmatpush1.bf16.msra.mxu0 0
  %328 = vmatprep.subr.bf16.mxu0 0
  %329 = vmatpush1.bf16.msra.mxu0 0
  %330 = vmatprep.subr.bf16.mxu0 0
  %331 = vmatpush1.bf16.msra.mxu0 0
  %332 = vmatprep.subr.bf16.mxu0 0
  %333 = vmatpush1.bf16.msra.mxu0 0
  %334 = vmatprep.subr.bf16.mxu0 0
  %335 = vmatpush1.bf16.msra.mxu0 0
  %336 = vmatprep.subr.bf16.mxu0 0
  %337 = vmatpush1.bf16.msra.mxu0 0
  %338 = vmatprep.subr.bf16.mxu0 0
  %339 = vmatpush1.bf16.msra.mxu0 0
  %340 = vmatprep.subr.bf16.mxu0 0
  %341 = vmatpush1.bf16.msra.mxu0 0
  %342 = vmatprep.subr.bf16.mxu0 0
  %343 = vmatpush1.bf16.msra.mxu0 0
  %344 = vmatprep.subr.bf16.mxu0 0
  %345 = vmatpush1.bf16.msra.mxu0 0
  %346 = vmatprep.subr.bf16.mxu0 0
  %347 = vmatpush1.bf16.msra.mxu0 0
  %348 = vmatprep.mubr.bf16.mxu0 0
  %349 = vmatmul.mubr.bf16.gmra.mrb[0].mxu0 %v311
  %v350 = vpop.f32.mrb[0].mxu0
  %v351 = vadd.f32 0.0, %v350
  %v352 = vpop.f32.mrb[0].mxu0
  %v353 = vpop.f32.mrb[0].mxu0
  %v354 = vadd.f32 0.0, %v353
  %v355 = vpop.f32.mrb[0].mxu0
  %356 = vmatprep.mubr.bf16.mxu0 0
  %357 = vmatmul.mubr.bf16.gmra.mrb[0].mxu0 %v314
  %v358 = vpop.f32.mrb[0].mxu0
  %v359 = vadd.f32 0.0, %v358
  %v360 = vpop.f32.mrb[0].mxu0
  %v361 = vpop.f32.mrb[0].mxu0
  %v362 = vpop.f32.mrb[0].mxu0
  %363 = vdwg.mxu0
  %v364 = vmax.f32 %v351, 0.0
  %v365 = vmax.f32 %v354, 0.0
  %v366 = vmax.f32 %v359, 0.0
  %s367 = scalar_lea.vmem %s1, 8
  %v368 = vld [vmem:[%s367] sm:$0xf]
  %v369 = vld [vmem:[%s367 + $0x4] sm:$0xf]
  %v372 = vunpack.c.l.b16 %v368
  %v373 = vunpack.c.l.b16 %v369
  %v374 = vpack.c.b16 %v373, %v372
  %377 = vrot.lane.b32.xlu0 %v158, 112
  %v378 = vpop.permute.xlu0 %377
  %379 = vrot.lane.b32.xlu0 %v159, 112
  %v380 = vpop.permute.xlu0 %379
  %v383 = vsel %vm237, %v374, 0
  %v386 = vsel %vm98, %v380, 0
  %388 = vmatprep.subr.bf16.mxu0 0
  %389 = vmatpush1.bf16.msra.mxu0 %v378
  %390 = vmatprep.subr.bf16.mxu0 0
  %391 = vmatpush1.bf16.msra.mxu0 %v386
  %392 = vmatprep.subr.bf16.mxu0 0
  %393 = vmatpush1.bf16.msra.mxu0 0
  %394 = vmatprep.subr.bf16.mxu0 0
  %395 = vmatpush1.bf16.msra.mxu0 0
  %396 = vmatprep.subr.bf16.mxu0 0
  %397 = vmatpush1.bf16.msra.mxu0 0
  %398 = vmatprep.subr.bf16.mxu0 0
  %399 = vmatpush1.bf16.msra.mxu0 0
  %400 = vmatprep.subr.bf16.mxu0 0
  %401 = vmatpush1.bf16.msra.mxu0 0
  %402 = vmatprep.subr.bf16.mxu0 0
  %403 = vmatpush1.bf16.msra.mxu0 0
  %404 = vmatprep.subr.bf16.mxu0 0
  %405 = vmatpush1.bf16.msra.mxu0 0
  %406 = vmatprep.subr.bf16.mxu0 0
  %407 = vmatpush1.bf16.msra.mxu0 0
  %408 = vmatprep.subr.bf16.mxu0 0
  %409 = vmatpush1.bf16.msra.mxu0 0
  %410 = vmatprep.subr.bf16.mxu0 0
  %411 = vmatpush1.bf16.msra.mxu0 0
  %412 = vmatprep.subr.bf16.mxu0 0
  %413 = vmatpush1.bf16.msra.mxu0 0
  %414 = vmatprep.subr.bf16.mxu0 0
  %415 = vmatpush1.bf16.msra.mxu0 0
  %416 = vmatprep.subr.bf16.mxu0 0
  %417 = vmatpush1.bf16.msra.mxu0 0
  %418 = vmatprep.subr.bf16.mxu0 0
  %419 = vmatpush1.bf16.msra.mxu0 0
  %420 = vmatprep.mubr.bf16.mxu0 0
  %421 = vmatmul.mubr.bf16.gmra.mrb[0].mxu0 %v383
  %v422 = vpop.f32.mrb[0].mxu0
  %v423 = vadd.f32 0.0, %v422
  %v424 = vpop.f32.mrb[0].mxu0
  %v425 = vpop.f32.mrb[0].mxu0
  %v426 = vadd.f32 0.0, %v425
  %v427 = vpop.f32.mrb[0].mxu0
  %428 = vdwg.mxu0
  %v429 = vmax.f32 %v423, 0.0
  %v430 = vmax.f32 %v426, 0.0
  %v431 = vpack.c.bf16 %v365, %v364
  %v432 = vpack.c.bf16 %v366, %v366
  %s433 = scalar_lea.vmem %s10, 8
  %v434 = vld [vmem:[%s433] sm:$0xf]
  %v435 = vld [vmem:[%s433 + $0x4] sm:$0xf]
  %v438 = vunpack.c.l.b16 %v434
  %v439 = vunpack.c.l.b16 %v435
  %v440 = vpack.c.b16 %v439, %v438
  %v443 = vsel %vm172, %v431, 0
  %v446 = vsel %vm172, %v432, 0
  %448 = vmatprep.subr.bf16.mxu0 0
  %449 = vmatpush1.bf16.msra.mxu0 %v440
  %450 = vmatprep.subr.bf16.mxu0 0
  %451 = vmatpush1.bf16.msra.mxu0 0
  %452 = vmatprep.subr.bf16.mxu0 0
  %453 = vmatpush1.bf16.msra.mxu0 0
  %454 = vmatprep.subr.bf16.mxu0 0
  %455 = vmatpush1.bf16.msra.mxu0 0
  %456 = vmatprep.subr.bf16.mxu0 0
  %457 = vmatpush1.bf16.msra.mxu0 0
  %458 = vmatprep.subr.bf16.mxu0 0
  %459 = vmatpush1.bf16.msra.mxu0 0
  %460 = vmatprep.subr.bf16.mxu0 0
  %461 = vmatpush1.bf16.msra.mxu0 0
  %462 = vmatprep.subr.bf16.mxu0 0
  %463 = vmatpush1.bf16.msra.mxu0 0
  %464 = vmatprep.subr.bf16.mxu0 0
  %465 = vmatpush1.bf16.msra.mxu0 0
  %466 = vmatprep.subr.bf16.mxu0 0
  %467 = vmatpush1.bf16.msra.mxu0 0
  %468 = vmatprep.subr.bf16.mxu0 0
  %469 = vmatpush1.bf16.msra.mxu0 0
  %470 = vmatprep.subr.bf16.mxu0 0
  %471 = vmatpush1.bf16.msra.mxu0 0
  %472 = vmatprep.subr.bf16.mxu0 0
  %473 = vmatpush1.bf16.msra.mxu0 0
  %474 = vmatprep.subr.bf16.mxu0 0
  %475 = vmatpush1.bf16.msra.mxu0 0
  %476 = vmatprep.subr.bf16.mxu0 0
  %477 = vmatpush1.bf16.msra.mxu0 0
  %478 = vmatprep.subr.bf16.mxu0 0
  %479 = vmatpush1.bf16.msra.mxu0 0
  %480 = vmatprep.mubr.bf16.mxu0 0
  %481 = vmatmul.mubr.bf16.gmra.mrb[0].mxu0 %v443
  %v482 = vpop.f32.mrb[0].mxu0
  %v483 = vadd.f32 0.0, %v482
  %v484 = vpop.f32.mrb[0].mxu0
  %v485 = vpop.f32.mrb[0].mxu0
  %v486 = vadd.f32 0.0, %v485
  %v487 = vpop.f32.mrb[0].mxu0
  %488 = vmatprep.mubr.bf16.mxu0 0
  %489 = vmatmul.mubr.bf16.gmra.mrb[0].mxu0 %v446
  %v490 = vpop.f32.mrb[0].mxu0
  %v491 = vadd.f32 0.0, %v490
  %v492 = vpop.f32.mrb[0].mxu0
  %v493 = vpop.f32.mrb[0].mxu0
  %v494 = vpop.f32.mrb[0].mxu0
  %495 = vdwg.mxu0
  %v498 = vunpack.c.l.b16 %v289
  %v499 = vunpack.c.l.b16 %v290
  %v500 = vpack.c.b16 %v499, %v498
  %v503 = vsel %vm172, %v287, 0
  %v506 = vsel %vm172, %v288, 0
  %508 = vmatprep.subr.bf16.mxu0 0
  %509 = vmatpush1.bf16.msra.mxu0 %v500
  %510 = vmatprep.subr.bf16.mxu0 0
  %511 = vmatpush1.bf16.msra.mxu0 0
  %512 = vmatprep.subr.bf16.mxu0 0
  %513 = vmatpush1.bf16.msra.mxu0 0
  %514 = vmatprep.subr.bf16.mxu0 0
  %515 = vmatpush1.bf16.msra.mxu0 0
  %516 = vmatprep.subr.bf16.mxu0 0
  %517 = vmatpush1.bf16.msra.mxu0 0
  %518 = vmatprep.subr.bf16.mxu0 0
  %519 = vmatpush1.bf16.msra.mxu0 0
  %520 = vmatprep.subr.bf16.mxu0 0
  %521 = vmatpush1.bf16.msra.mxu0 0
  %522 = vmatprep.subr.bf16.mxu0 0
  %523 = vmatpush1.bf16.msra.mxu0 0
  %524 = vmatprep.subr.bf16.mxu0 0
  %525 = vmatpush1.bf16.msra.mxu0 0
  %526 = vmatprep.subr.bf16.mxu0 0
  %527 = vmatpush1.bf16.msra.mxu0 0
  %528 = vmatprep.subr.bf16.mxu0 0
  %529 = vmatpush1.bf16.msra.mxu0 0
  %530 = vmatprep.subr.bf16.mxu0 0
  %531 = vmatpush1.bf16.msra.mxu0 0
  %532 = vmatprep.subr.bf16.mxu0 0
  %533 = vmatpush1.bf16.msra.mxu0 0
  %534 = vmatprep.subr.bf16.mxu0 0
  %535 = vmatpush1.bf16.msra.mxu0 0
  %536 = vmatprep.subr.bf16.mxu0 0
  %537 = vmatpush1.bf16.msra.mxu0 0
  %538 = vmatprep.subr.bf16.mxu0 0
  %539 = vmatpush1.bf16.msra.mxu0 0
  %540 = vmatprep.mubr.bf16.mxu0 0
  %541 = vmatmul.mubr.bf16.gmra.mrb[0].mxu0 %v503
  %v542 = vpop.f32.mrb[0].mxu0
  %v543 = vadd.f32 %v483, %v542
  %v544 = vpop.f32.mrb[0].mxu0
  %v545 = vpop.f32.mrb[0].mxu0
  %v546 = vadd.f32 %v486, %v545
  %v547 = vpop.f32.mrb[0].mxu0
  %548 = vmatprep.mubr.bf16.mxu0 0
  %549 = vmatmul.mubr.bf16.gmra.mrb[0].mxu0 %v506
  %v550 = vpop.f32.mrb[0].mxu0
  %v551 = vadd.f32 %v491, %v550
  %v552 = vpop.f32.mrb[0].mxu0
  %v553 = vpop.f32.mrb[0].mxu0
  %v554 = vpop.f32.mrb[0].mxu0
  %555 = vdwg.mxu0
  %v556 = vpack.c.bf16 %v430, %v429
  %s557 = scalar_lea.vmem %s12, 8
  %v558 = vld [vmem:[%s557] sm:$0xf]
  %v559 = vld [vmem:[%s557 + $0x4] sm:$0xf]
  %v562 = vunpack.c.l.b16 %v558
  %v563 = vunpack.c.l.b16 %v559
  %v564 = vpack.c.b16 %v563, %v562
  %v567 = vsel %vm172, %v556, 0
  %569 = vmatprep.subr.bf16.mxu0 0
  %570 = vmatpush1.bf16.msra.mxu0 %v564
  %571 = vmatprep.subr.bf16.mxu0 0
  %572 = vmatpush1.bf16.msra.mxu0 0
  %573 = vmatprep.subr.bf16.mxu0 0
  %574 = vmatpush1.bf16.msra.mxu0 0
  %575 = vmatprep.subr.bf16.mxu0 0
  %576 = vmatpush1.bf16.msra.mxu0 0
  %577 = vmatprep.subr.bf16.mxu0 0
  %578 = vmatpush1.bf16.msra.mxu0 0
  %579 = vmatprep.subr.bf16.mxu0 0
  %580 = vmatpush1.bf16.msra.mxu0 0
  %581 = vmatprep.subr.bf16.mxu0 0
  %582 = vmatpush1.bf16.msra.mxu0 0
  %583 = vmatprep.subr.bf16.mxu0 0
  %584 = vmatpush1.bf16.msra.mxu0 0
  %585 = vmatprep.subr.bf16.mxu0 0
  %586 = vmatpush1.bf16.msra.mxu0 0
  %587 = vmatprep.subr.bf16.mxu0 0
  %588 = vmatpush1.bf16.msra.mxu0 0
  %589 = vmatprep.subr.bf16.mxu0 0
  %590 = vmatpush1.bf16.msra.mxu0 0
  %591 = vmatprep.subr.bf16.mxu0 0
  %592 = vmatpush1.bf16.msra.mxu0 0
  %593 = vmatprep.subr.bf16.mxu0 0
  %594 = vmatpush1.bf16.msra.mxu0 0
  %595 = vmatprep.subr.bf16.mxu0 0
  %596 = vmatpush1.bf16.msra.mxu0 0
  %597 = vmatprep.subr.bf16.mxu0 0
  %598 = vmatpush1.bf16.msra.mxu0 0
  %599 = vmatprep.subr.bf16.mxu0 0
  %600 = vmatpush1.bf16.msra.mxu0 0
  %601 = vmatprep.mubr.bf16.mxu0 0
  %602 = vmatmul.mubr.bf16.gmra.mrb[0].mxu0 %v567
  %v603 = vpop.f32.mrb[0].mxu0
  %v604 = vadd.f32 0.0, %v603
  %v605 = vpop.f32.mrb[0].mxu0
  %v606 = vpop.f32.mrb[0].mxu0
  %v607 = vadd.f32 0.0, %v606
  %v608 = vpop.f32.mrb[0].mxu0
  %609 = vdwg.mxu0
  %v612 = vunpack.c.l.b16 %v292
  %v613 = vunpack.c.l.b16 %v293
  %v614 = vpack.c.b16 %v613, %v612
  %v617 = vsel %vm172, %v291, 0
  %619 = vmatprep.subr.bf16.mxu0 0
  %620 = vmatpush1.bf16.msra.mxu0 %v614
  %621 = vmatprep.subr.bf16.mxu0 0
  %622 = vmatpush1.bf16.msra.mxu0 0
  %623 = vmatprep.subr.bf16.mxu0 0
  %624 = vmatpush1.bf16.msra.mxu0 0
  %625 = vmatprep.subr.bf16.mxu0 0
  %626 = vmatpush1.bf16.msra.mxu0 0
  %627 = vmatprep.subr.bf16.mxu0 0
  %628 = vmatpush1.bf16.msra.mxu0 0
  %629 = vmatprep.subr.bf16.mxu0 0
  %630 = vmatpush1.bf16.msra.mxu0 0
  %631 = vmatprep.subr.bf16.mxu0 0
  %632 = vmatpush1.bf16.msra.mxu0 0
  %633 = vmatprep.subr.bf16.mxu0 0
  %634 = vmatpush1.bf16.msra.mxu0 0
  %635 = vmatprep.subr.bf16.mxu0 0
  %636 = vmatpush1.bf16.msra.mxu0 0
  %637 = vmatprep.subr.bf16.mxu0 0
  %638 = vmatpush1.bf16.msra.mxu0 0
  %639 = vmatprep.subr.bf16.mxu0 0
  %640 = vmatpush1.bf16.msra.mxu0 0
  %641 = vmatprep.subr.bf16.mxu0 0
  %642 = vmatpush1.bf16.msra.mxu0 0
  %643 = vmatprep.subr.bf16.mxu0 0
  %644 = vmatpush1.bf16.msra.mxu0 0
  %645 = vmatprep.subr.bf16.mxu0 0
  %646 = vmatpush1.bf16.msra.mxu0 0
  %647 = vmatprep.subr.bf16.mxu0 0
  %648 = vmatpush1.bf16.msra.mxu0 0
  %649 = vmatprep.subr.bf16.mxu0 0
  %650 = vmatpush1.bf16.msra.mxu0 0
  %651 = vmatprep.mubr.bf16.mxu0 0
  %652 = vmatmul.mubr.bf16.gmra.mrb[0].mxu0 %v617
  %v653 = vpop.f32.mrb[0].mxu0
  %v654 = vadd.f32 %v604, %v653
  %v655 = vpop.f32.mrb[0].mxu0
  %v656 = vpop.f32.mrb[0].mxu0
  %v657 = vadd.f32 %v607, %v656
  %v658 = vpop.f32.mrb[0].mxu0
  %659 = vdwg.mxu0
  %v660 = vld [vmem:[%s3] sm:$0xf]
  %v661 = vld [vmem:[%s3 + $0x4] sm:$0xf]
  %v662 = vld [vmem:[%s3 + $0x8] sm:$0xf]
  %v663 = vld [vmem:[%s6] sm:$0xf]
  %v664 = vld [vmem:[%s6 + $0x4] sm:$0xf]
  %v665 = vld [vmem:[%s6 + $0x8] sm:$0xf]
  %v666 = vld [vmem:[%s7] sm:$0x1]
  %v668 = vlaneseq
  %v669 = vshrl.u32 %v668, 7
  %v670 = vsub.s32 0, %v669
  %v671 = vrot.slane %v666, %v670
  %v676 = vunpack.c.l.b16 %v660
  %v677 = vunpack.c.l.b16 %v661
  %v678 = vunpack.c.l.b16 %v662
  %v679 = vpack.c.b16 %v677, %v676
  %v680 = vpack.c.b16 %v678, %v678
  %v684 = vunpack.c.l.b16 %v663
  %v685 = vunpack.c.l.b16 %v664
  %v686 = vunpack.c.l.b16 %v665
  %v687 = vpack.c.b16 %v685, %v684
  %v688 = vpack.c.b16 %v686, %v686
  %v691 = vsel %vm237, %v679, 0
  %v694 = vsel %vm237, %v680, 0
  %v697 = vsel %vm98, %v688, 0
  %699 = vmatprep.subr.bf16.mxu0 0
  %700 = vmatpush1.bf16.msra.mxu0 %v687
  %701 = vmatprep.subr.bf16.mxu0 0
  %702 = vmatpush1.bf16.msra.mxu0 %v697
  %703 = vmatprep.subr.bf16.mxu0 0
  %704 = vmatpush1.bf16.msra.mxu0 0
  %705 = vmatprep.subr.bf16.mxu0 0
  %706 = vmatpush1.bf16.msra.mxu0 0
  %707 = vmatprep.subr.bf16.mxu0 0
  %708 = vmatpush1.bf16.msra.mxu0 0
  %709 = vmatprep.subr.bf16.mxu0 0
  %710 = vmatpush1.bf16.msra.mxu0 0
  %711 = vmatprep.subr.bf16.mxu0 0
  %712 = vmatpush1.bf16.msra.mxu0 0
  %713 = vmatprep.subr.bf16.mxu0 0
  %714 = vmatpush1.bf16.msra.mxu0 0
  %715 = vmatprep.subr.bf16.mxu0 0
  %716 = vmatpush1.bf16.msra.mxu0 0
  %717 = vmatprep.subr.bf16.mxu0 0
  %718 = vmatpush1.bf16.msra.mxu0 0
  %719 = vmatprep.subr.bf16.mxu0 0
  %720 = vmatpush1.bf16.msra.mxu0 0
  %721 = vmatprep.subr.bf16.mxu0 0
  %722 = vmatpush1.bf16.msra.mxu0 0
  %723 = vmatprep.subr.bf16.mxu0 0
  %724 = vmatpush1.bf16.msra.mxu0 0
  %725 = vmatprep.subr.bf16.mxu0 0
  %726 = vmatpush1.bf16.msra.mxu0 0
  %727 = vmatprep.subr.bf16.mxu0 0
  %728 = vmatpush1.bf16.msra.mxu0 0
  %729 = vmatprep.subr.bf16.mxu0 0
  %730 = vmatpush1.bf16.msra.mxu0 0
  %731 = vmatprep.mubr.bf16.mxu0 0
  %732 = vmatmul.mubr.bf16.gmra.mrb[0].mxu0 %v691
  %v733 = vpop.f32.mrb[0].mxu0
  %v734 = vadd.f32 %v671, %v733
  %v735 = vpop.f32.mrb[0].mxu0
  %v736 = vpop.f32.mrb[0].mxu0
  %v737 = vadd.f32 %v671, %v736
  %v738 = vpop.f32.mrb[0].mxu0
  %739 = vmatprep.mubr.bf16.mxu0 0
  %740 = vmatmul.mubr.bf16.gmra.mrb[0].mxu0 %v694
  %v741 = vpop.f32.mrb[0].mxu0
  %v742 = vadd.f32 %v671, %v741
  %v743 = vpop.f32.mrb[0].mxu0
  %v744 = vpop.f32.mrb[0].mxu0
  %v745 = vpop.f32.mrb[0].mxu0
  %746 = vdwg.mxu0
  %v747 = vmax.f32 %v734, 0.0
  %v748 = vmax.f32 %v737, 0.0
  %v749 = vmax.f32 %v742, 0.0
  %v750 = vld [vmem:[%s4] sm:$0xf]
  %v751 = vld [vmem:[%s4 + $0x4] sm:$0xf]
  %v752 = vld [vmem:[%s8] sm:$0xf]
  %v753 = vld [vmem:[%s8 + $0x4] sm:$0xf]
  %v754 = vld [vmem:[%s8 + $0x8] sm:$0xf]
  %v755 = vld [vmem:[%s9] sm:$0x1]
  %v757 = vlaneseq
  %v758 = vshrl.u32 %v757, 7
  %v759 = vsub.s32 0, %v758
  %v760 = vrot.slane %v755, %v759
  %v764 = vunpack.c.l.b16 %v750
  %v765 = vunpack.c.l.b16 %v751
  %v766 = vpack.c.b16 %v765, %v764
  %v770 = vunpack.c.l.b16 %v752
  %v771 = vunpack.c.l.b16 %v753
  %v772 = vunpack.c.l.b16 %v754
  %v773 = vpack.c.b16 %v771, %v770
  %v774 = vpack.c.b16 %v772, %v772
  %v777 = vsel %vm237, %v766, 0
  %v780 = vsel %vm98, %v774, 0
  %782 = vmatprep.subr.bf16.mxu0 0
  %783 = vmatpush1.bf16.msra.mxu0 %v773
  %784 = vmatprep.subr.bf16.mxu0 0
  %785 = vmatpush1.bf16.msra.mxu0 %v780
  %786 = vmatprep.subr.bf16.mxu0 0
  %787 = vmatpush1.bf16.msra.mxu0 0
  %788 = vmatprep.subr.bf16.mxu0 0
  %789 = vmatpush1.bf16.msra.mxu0 0
  %790 = vmatprep.subr.bf16.mxu0 0
  %791 = vmatpush1.bf16.msra.mxu0 0
  %792 = vmatprep.subr.bf16.mxu0 0
  %793 = vmatpush1.bf16.msra.mxu0 0
  %794 = vmatprep.subr.bf16.mxu0 0
  %795 = vmatpush1.bf16.msra.mxu0 0
  %796 = vmatprep.subr.bf16.mxu0 0
  %797 = vmatpush1.bf16.msra.mxu0 0
  %798 = vmatprep.subr.bf16.mxu0 0
  %799 = vmatpush1.bf16.msra.mxu0 0
  %800 = vmatprep.subr.bf16.mxu0 0
  %801 = vmatpush1.bf16.msra.mxu0 0
  %802 = vmatprep.subr.bf16.mxu0 0
  %803 = vmatpush1.bf16.msra.mxu0 0
  %804 = vmatprep.subr.bf16.mxu0 0
  %805 = vmatpush1.bf16.msra.mxu0 0
  %806 = vmatprep.subr.bf16.mxu0 0
  %807 = vmatpush1.bf16.msra.mxu0 0
  %808 = vmatprep.subr.bf16.mxu0 0
  %809 = vmatpush1.bf16.msra.mxu0 0
  %810 = vmatprep.subr.bf16.mxu0 0
  %811 = vmatpush1.bf16.msra.mxu0 0
  %812 = vmatprep.subr.bf16.mxu0 0
  %813 = vmatpush1.bf16.msra.mxu0 0
  %814 = vmatprep.mubr.bf16.mxu0 0
  %815 = vmatmul.mubr.bf16.gmra.mrb[0].mxu0 %v777
  %v816 = vpop.f32.mrb[0].mxu0
  %v817 = vadd.f32 %v760, %v816
  %v818 = vpop.f32.mrb[0].mxu0
  %v819 = vpop.f32.mrb[0].mxu0
  %v820 = vadd.f32 %v760, %v819
  %v821 = vpop.f32.mrb[0].mxu0
  %822 = vdwg.mxu0
  %v823 = vmax.f32 %v817, 0.0
  %v824 = vmax.f32 %v820, 0.0
  %v825 = vpack.c.bf16 %v748, %v747
  %v826 = vpack.c.bf16 %v749, %v749
  %v827 = vld [vmem:[%s11] sm:$0xf]
  %v828 = vld [vmem:[%s11 + $0x4] sm:$0xf]
  %v831 = vunpack.c.l.b16 %v827
  %v832 = vunpack.c.l.b16 %v828
  %v833 = vpack.c.b16 %v832, %v831
  %v836 = vsel %vm172, %v825, 0
  %v839 = vsel %vm172, %v826, 0
  %841 = vmatprep.subr.bf16.mxu0 0
  %842 = vmatpush1.bf16.msra.mxu0 %v833
  %843 = vmatprep.subr.bf16.mxu0 0
  %844 = vmatpush1.bf16.msra.mxu0 0
  %845 = vmatprep.subr.bf16.mxu0 0
  %846 = vmatpush1.bf16.msra.mxu0 0
  %847 = vmatprep.subr.bf16.mxu0 0
  %848 = vmatpush1.bf16.msra.mxu0 0
  %849 = vmatprep.subr.bf16.mxu0 0
  %850 = vmatpush1.bf16.msra.mxu0 0
  %851 = vmatprep.subr.bf16.mxu0 0
  %852 = vmatpush1.bf16.msra.mxu0 0
  %853 = vmatprep.subr.bf16.mxu0 0
  %854 = vmatpush1.bf16.msra.mxu0 0
  %855 = vmatprep.subr.bf16.mxu0 0
  %856 = vmatpush1.bf16.msra.mxu0 0
  %857 = vmatprep.subr.bf16.mxu0 0
  %858 = vmatpush1.bf16.msra.mxu0 0
  %859 = vmatprep.subr.bf16.mxu0 0
  %860 = vmatpush1.bf16.msra.mxu0 0
  %861 = vmatprep.subr.bf16.mxu0 0
  %862 = vmatpush1.bf16.msra.mxu0 0
  %863 = vmatprep.subr.bf16.mxu0 0
  %864 = vmatpush1.bf16.msra.mxu0 0
  %865 = vmatprep.subr.bf16.mxu0 0
  %866 = vmatpush1.bf16.msra.mxu0 0
  %867 = vmatprep.subr.bf16.mxu0 0
  %868 = vmatpush1.bf16.msra.mxu0 0
  %869 = vmatprep.subr.bf16.mxu0 0
  %870 = vmatpush1.bf16.msra.mxu0 0
  %871 = vmatprep.subr.bf16.mxu0 0
  %872 = vmatpush1.bf16.msra.mxu0 0
  %873 = vmatprep.mubr.bf16.mxu0 0
  %874 = vmatmul.mubr.bf16.gmra.mrb[0].mxu0 %v836
  %v875 = vpop.f32.mrb[0].mxu0
  %v876 = vadd.f32 0.0, %v875
  %v877 = vpop.f32.mrb[0].mxu0
  %v878 = vpop.f32.mrb[0].mxu0
  %v879 = vadd.f32 0.0, %v878
  %v880 = vpop.f32.mrb[0].mxu0
  %881 = vmatprep.mubr.bf16.mxu0 0
  %882 = vmatmul.mubr.bf16.gmra.mrb[0].mxu0 %v839
  %v883 = vpop.f32.mrb[0].mxu0
  %v884 = vadd.f32 0.0, %v883
  %v885 = vpop.f32.mrb[0].mxu0
  %v886 = vpop.f32.mrb[0].mxu0
  %v887 = vpop.f32.mrb[0].mxu0
  %888 = vdwg.mxu0
  %v889 = vadd.f32 %v543, %v876
  %v890 = vadd.f32 %v546, %v879
  %v891 = vadd.f32 %v551, %v884
  %vm892 = vcmask 261120
  %893 = vst.msk [vmem:[%s14] sm:$0xff] %vm892, %v889
  %894 = vst.msk [vmem:[%s14 + $0x8] sm:$0xff] %vm892, %v890
  %895 = vst.msk [vmem:[%s14 + $0x10] sm:$0xff] %vm892, %v891
  %v896 = vpack.c.bf16 %v824, %v823
  %v897 = vld [vmem:[%s13] sm:$0xf]
  %v898 = vld [vmem:[%s13 + $0x4] sm:$0xf]
  %v901 = vunpack.c.l.b16 %v897
  %v902 = vunpack.c.l.b16 %v898
  %v903 = vpack.c.b16 %v902, %v901
  %v906 = vsel %vm172, %v896, 0
  %908 = vmatprep.subr.bf16.mxu0 0
  %909 = vmatpush1.bf16.msra.mxu0 %v903
  %910 = vmatprep.subr.bf16.mxu0 0
  %911 = vmatpush1.bf16.msra.mxu0 0
  %912 = vmatprep.subr.bf16.mxu0 0
  %913 = vmatpush1.bf16.msra.mxu0 0
  %914 = vmatprep.subr.bf16.mxu0 0
  %915 = vmatpush1.bf16.msra.mxu0 0
  %916 = vmatprep.subr.bf16.mxu0 0
  %917 = vmatpush1.bf16.msra.mxu0 0
  %918 = vmatprep.subr.bf16.mxu0 0
  %919 = vmatpush1.bf16.msra.mxu0 0
  %920 = vmatprep.subr.bf16.mxu0 0
  %921 = vmatpush1.bf16.msra.mxu0 0
  %922 = vmatprep.subr.bf16.mxu0 0
  %923 = vmatpush1.bf16.msra.mxu0 0
  %924 = vmatprep.subr.bf16.mxu0 0
  %925 = vmatpush1.bf16.msra.mxu0 0
  %926 = vmatprep.subr.bf16.mxu0 0
  %927 = vmatpush1.bf16.msra.mxu0 0
  %928 = vmatprep.subr.bf16.mxu0 0
  %929 = vmatpush1.bf16.msra.mxu0 0
  %930 = vmatprep.subr.bf16.mxu0 0
  %931 = vmatpush1.bf16.msra.mxu0 0
  %932 = vmatprep.subr.bf16.mxu0 0
  %933 = vmatpush1.bf16.msra.mxu0 0
  %934 = vmatprep.subr.bf16.mxu0 0
  %935 = vmatpush1.bf16.msra.mxu0 0
  %936 = vmatprep.subr.bf16.mxu0 0
  %937 = vmatpush1.bf16.msra.mxu0 0
  %938 = vmatprep.subr.bf16.mxu0 0
  %939 = vmatpush1.bf16.msra.mxu0 0
  %940 = vmatprep.mubr.bf16.mxu0 0
  %941 = vmatmul.mubr.bf16.gmra.mrb[0].mxu0 %v906
  %v942 = vpop.f32.mrb[0].mxu0
  %v943 = vadd.f32 0.0, %v942
  %v944 = vpop.f32.mrb[0].mxu0
  %v945 = vpop.f32.mrb[0].mxu0
  %v946 = vadd.f32 0.0, %v945
  %v947 = vpop.f32.mrb[0].mxu0
  %948 = vdwg.mxu0
  %v949 = vadd.f32 %v654, %v943
  %v950 = vadd.f32 %v657, %v946
  %951 = vst.msk [vmem:[%s15] sm:$0xff] %vm892, %v949
  %952 = vst.msk [vmem:[%s15 + $0x8] sm:$0xff] %vm892, %v950
  // Predicated region
  $region58: #{graph_matrix_completion_forward.2} parent=0 // pred_check
    _
  $region59: #{graph_matrix_completion_forward.2} parent=0 // pred_check_branch
    %954 = sbr.rel (0) target = $region61
  $region60: #{graph_matrix_completion_forward.2} parent=0 // pred_region
    _
  $region61: #{graph_matrix_completion_forward.2} parent=0 // pred_fallthru
    _
  // Predicated region
  $region62: #{graph_matrix_completion_forward.2} parent=0 // pred_check
    _
  $region63: #{graph_matrix_completion_forward.2} parent=0 // pred_check_branch
    %956 = sbr.rel (0) target = $region65
  $region64: #{graph_matrix_completion_forward.2} parent=0 // pred_region
    _
  $region65: #{graph_matrix_completion_forward.2} parent=0 // pred_fallthru
    _
  // Predicated region
  $region66: #{graph_matrix_completion_forward.2} parent=0 // pred_check
    _
  $region67: #{graph_matrix_completion_forward.2} parent=0 // pred_check_branch
    %958 = sbr.rel (0) target = $region69
  $region68: #{graph_matrix_completion_forward.2} parent=0 // pred_region
    _
  $region69: #{graph_matrix_completion_forward.2} parent=0 // pred_fallthru
    _
  // Predicated region
  $region70: #{graph_matrix_completion_forward.2} parent=0 // pred_check
    _
  $region71: #{graph_matrix_completion_forward.2} parent=0 // pred_check_branch
    %960 = sbr.rel (0) target = $region73
  $region72: #{graph_matrix_completion_forward.2} parent=0 // pred_region
    _
  $region73: #{graph_matrix_completion_forward.2} parent=0 // pred_fallthru
    _

</llo_original>
